<compile_context>
chip_gen: v7x
topology: tpu7x:2x2x1
jax: 0.10.0
libtpu: 0.0.40
codegen_flags: <defaults>
</compile_context>

<pallas_src>
import functools
import math

import jax
import jax.numpy as jnp
from jax import lax
from jax.experimental import pallas as pl
from jax.experimental.pallas import tpu as pltpu


def _flash_qkv_kernel(*refs, num_heads, ch, has_enc, shared_qkv):
    # Unpack refs according to the (static) wrapper configuration.
    idx = 0
    q_ref = refs[idx]; idx += 1                      # (1, 3*H*C, Tq) query tile
    if shared_qkv:
        kv_ref = q_ref                               # q tile == full sequence
    else:
        kv_ref = refs[idx]; idx += 1                 # (1, 3*H*C, Skv) kv chunk
    enc_ref = None
    if has_enc:
        enc_ref = refs[idx]; idx += 1                # (1, 2*H*C, S_enc)
    out_ref = refs[idx]; idx += 1                    # (1, H*C, Tq)
    m_ref, l_ref, acc_ref = refs[idx:idx + 3]        # VMEM scratch accumulators

    H, C = num_heads, ch
    Tq = q_ref.shape[-1]
    Skv = kv_ref.shape[-1]
    ki = pl.program_id(2)
    n_kv = pl.num_programs(2)

    # Fold both softmax scales onto q: (q*s)*(k*s) == (q*s*s)*k with f32 MXU
    # accumulation; saves a full VPU pass + VMEM copy of K every kv step.
    scale2 = 1.0 / math.sqrt(C)
    # NOTE: the q block fetches all 3*H*C rows (q/k/v rows are interleaved per
    # head in the fused layout) but only the H*C query rows are used; it is
    # fetched once per (batch, q-tile), so this over-fetch is small vs KV traffic.
    q = q_ref[0].reshape(H, 3 * C, Tq)[:, :C, :]     # (H, C, Tq)
    qs = q * scale2

    def online_update(k_blk, v_blk):
        # k_blk, v_blk: (H, C, S_blk) in the input dtype (head-batched MXU).
        # sim[h, s, t] = sum_c k[h,c,s] * qs[h,c,t]  — queries on lanes.
        sim = lax.dot_general(k_blk, qs, (((1,), (1,)), ((0,), (0,))),
                              preferred_element_type=jnp.float32)    # (H,S,Tq) f32
        m_prev = m_ref[...]                                          # (H,1,Tq)
        m_new = jnp.maximum(m_prev, jnp.max(sim, axis=1, keepdims=True))
        alpha = jnp.exp(m_prev - m_new)                              # (H,1,Tq)
        p = jnp.exp(sim - m_new)                                     # (H,S,Tq) f32
        l_ref[...] = alpha * l_ref[...] + jnp.sum(p, axis=1, keepdims=True)
        pv = lax.dot_general(v_blk, p.astype(v_blk.dtype),           # (H,C,Tq) f32
                             (((2,), (1,)), ((0,), (0,))),
                             preferred_element_type=jnp.float32)
        acc_ref[...] = alpha * acc_ref[...] + pv
        m_ref[...] = m_new

    @pl.when(ki == 0)
    def _init():
        m_ref[...] = jnp.full(m_ref.shape, -jnp.inf, m_ref.dtype)
        l_ref[...] = jnp.zeros(l_ref.shape, l_ref.dtype)
        acc_ref[...] = jnp.zeros(acc_ref.shape, acc_ref.dtype)

    if has_enc:
        # encoder k/v share the softmax with the self k/v; the online update is
        # order-invariant, so just fold them in as an extra chunk once per tile.
        @pl.when(ki == 0)
        def _enc():
            Se = enc_ref.shape[-1]
            e = enc_ref[0].reshape(H, 2 * C, Se)
            online_update(e[:, :C, :], e[:, C:, :])

    kv = kv_ref[0].reshape(H, 3 * C, Skv)
    online_update(kv[:, C:2 * C, :], kv[:, 2 * C:, :])

    @pl.when(ki == n_kv - 1)
    def _finalize():
        l = l_ref[...]
        r = pl.reciprocal(l, approx=True)       # EUP estimate ...
        r = r * (2.0 - l * r)                   # ... + one Newton step (tiny tensor)
        out_ref[0] = (acc_ref[...] * r).reshape(H * C, Tq).astype(out_ref.dtype)


def _pick_block(total, target):
    """Largest 128-multiple <= target that divides `total` (else the full dim)."""
    if total % 128 != 0 or total <= target:
        return total
    blk = max(128, (target // 128) * 128)
    while total % blk != 0:
        blk -= 128
    return blk


def qkv_attention(qkv, encoder_kv=None, *, num_heads, q_block=None, kv_block=512):
    """Pallas TPU forward of QKVAttention.

    qkv:        (B, H*C*3, T)
    encoder_kv: optional (B, H*C*2, S_enc)
    returns:    (B, H*C, T)
    """
    B, width, T = qkv.shape
    assert width % (3 * num_heads) == 0
    ch = width // (3 * num_heads)
    inner = num_heads * ch

    has_enc = encoder_kv is not None
    if has_enc:
        assert encoder_kv.shape[0] == B
        assert encoder_kv.shape[1] == 2 * inner
    s_enc = encoder_kv.shape[-1] if has_enc else 0

    # Per-chip sizing: physical VMEM drives the default q tile and vmem limit.
    try:
        phys_vmem = int(pltpu.get_tpu_info().vmem_capacity_bytes)
    except Exception:
        phys_vmem = 64 * 1024 * 1024              # v7x-conservative fallback
    if q_block is None:
        q_block = 512 if phys_vmem >= 96 * 1024 * 1024 else 256

    # TODO(synk): pad + (-inf)-mask the sequence tail instead of falling back
    # to a single full-length tile when T is not a multiple of 128.
    q_blk = _pick_block(T, q_block)
    if B == 1 and T // q_blk < 2 and T % 256 == 0:
        q_blk = T // 2                            # >= 2 parallel steps for 2-TC chips
    kv_blk = _pick_block(T, kv_block)
    n_q = T // q_blk
    n_kv = T // kv_blk
    shared_qkv = (q_blk == T and kv_blk == T)

    kernel = functools.partial(
        _flash_qkv_kernel, num_heads=num_heads, ch=ch,
        has_enc=has_enc, shared_qkv=shared_qkv)

    in_specs = [pl.BlockSpec((1, width, q_blk), lambda b, qi, ki: (b, 0, qi))]
    args = [qkv]
    if not shared_qkv:
        in_specs.append(pl.BlockSpec((1, width, kv_blk), lambda b, qi, ki: (b, 0, ki)))
        args.append(qkv)
    if has_enc:
        in_specs.append(
            pl.BlockSpec((1, 2 * inner, s_enc), lambda b, qi, ki: (b, 0, 0)))
        args.append(encoder_kv)

    itemsize = jnp.dtype(qkv.dtype).itemsize
    f32b = 4
    # Per-step footprint: double-buffered pipeline blocks + scratch + f32
    # score/probability temporaries, plus headroom for compiler temporaries.
    footprint = (
        2 * width * q_blk * itemsize
        + (0 if shared_qkv else 2 * width * kv_blk * itemsize)
        + 2 * inner * q_blk * itemsize
        + (2 * 2 * inner * s_enc * itemsize if has_enc else 0)
        + num_heads * (ch + 16) * q_blk * f32b
        + 2 * num_heads * max(kv_blk, s_enc) * q_blk * (f32b + itemsize)
    )
    vmem_limit = max(32 * 1024 * 1024,
                     min(footprint + 16 * 1024 * 1024, phys_vmem * 3 // 4))

    s_total = T + s_enc
    cost = pl.CostEstimate(
        flops=int(4 * B * inner * T * s_total),
        transcendentals=int(B * num_heads * T * s_total),
        bytes_accessed=int(itemsize * (
            B * width * T
            + (0 if shared_qkv else n_q * B * width * T)
            + (encoder_kv.size if has_enc else 0)
            + B * inner * T)),
    )

    return pl.pallas_call(
        kernel,
        out_shape=jax.ShapeDtypeStruct((B, inner, T), qkv.dtype),
        grid_spec=pltpu.PrefetchScalarGridSpec(
            num_scalar_prefetch=0,
            grid=(B, n_q, n_kv),
            in_specs=in_specs,
            out_specs=pl.BlockSpec((1, inner, q_blk), lambda b, qi, ki: (b, 0, qi)),
            scratch_shapes=[
                pltpu.VMEM((num_heads, 1, q_blk), jnp.float32),   # running max m
                pltpu.VMEM((num_heads, 1, q_blk), jnp.float32),   # running sum l
                pltpu.VMEM((num_heads, ch, q_blk), jnp.float32),  # PV accumulator
            ],
        ),
        compiler_params=pltpu.CompilerParams(
            dimension_semantics=("parallel", "parallel", "arbitrary"),
            vmem_limit_bytes=int(vmem_limit),
        ),
        cost_estimate=cost,
    )(*args)


def _reference(qkv, num_heads, encoder_kv=None):
    """Pure-JAX port of the PyTorch forward (source of truth for the test)."""
    bs, width, length = qkv.shape
    ch = width // (3 * num_heads)
    r = qkv.reshape(bs * num_heads, ch * 3, length)
    q, k, v = r[:, :ch], r[:, ch:2 * ch], r[:, 2 * ch:]
    if encoder_kv is not None:
        e = encoder_kv.reshape(bs * num_heads, ch * 2, -1)
        k = jnp.concatenate([e[:, :ch], k], axis=-1)
        v = jnp.concatenate([e[:, ch:], v], axis=-1)
    scale = 1.0 / math.sqrt(math.sqrt(ch))
    w = jnp.einsum('bct,bcs->bts', q * scale, k * scale)
    w = jax.nn.softmax(w.astype(jnp.float32), axis=-1).astype(w.dtype)
    a = jnp.einsum('bts,bcs->bct', w, v)
    return a.reshape(bs, -1, length)


if __name__ == "__main__":
    B, H, C = 2, 2, 64                    # width = 3*H*C = 384
    width = 3 * H * C

    key = jax.random.PRNGKey(0)
    k1, k2, k3, k4 = jax.random.split(key, 4)

    def check(out, ref, name):
        assert out.shape == ref.shape, (name, out.shape, ref.shape)
        err = float(jnp.max(jnp.abs(out - ref)))
        assert jnp.allclose(out, ref, atol=1e-4, rtol=1e-4), (name, err)

    # 1) plain self-attention (single-tile fast path: shared qkv block)
    qkv = jax.random.normal(k1, (B, width, 128), jnp.float32)
    out = jax.block_until_ready(qkv_attention(qkv, num_heads=H))
    check(out, _reference(qkv, num_heads=H), "self")

    # 2) with encoder_kv (keys/values prepended along the sequence axis)
    enc = jax.random.normal(k2, (B, 2 * H * C, 128), jnp.float32)
    out2 = jax.block_until_ready(qkv_attention(qkv, enc, num_heads=H))
    check(out2, _reference(qkv, num_heads=H, encoder_kv=enc), "encoder_kv")

    # 3) flash path: query AND key/value tiling + encoder chunk, grid (B,2,2)
    qkv_long = jax.random.normal(k3, (B, width, 256), jnp.float32)
    out3 = jax.block_until_ready(
        qkv_attention(qkv_long, enc, num_heads=H, q_block=128, kv_block=128))
    check(out3, _reference(qkv_long, num_heads=H, encoder_kv=enc), "flash-tiled")

    # 4) B=1 with default tiles: query axis force-split so 2-TC chips get work
    qkv_b1 = jax.random.normal(k4, (1, width, 256), jnp.float32)
    out4 = jax.block_until_ready(qkv_attention(qkv_b1, num_heads=H))
    check(out4, _reference(qkv_b1, num_heads=H), "b1-split")

    print("KERNEL_OK")
</pallas_src>

<mosaic_0001>
module attributes {stable_mosaic.version = 11 : i64} {
  func.func @_flash_qkv_kernel(%arg0: i32, %arg1: i32, %arg2: i32, %arg3: memref<1x384x128xf32, #tpu.memory_space<vmem>>, %arg4: memref<1x128x128xf32, #tpu.memory_space<vmem>>, %arg5: memref<2x1x128xf32, #tpu.memory_space<vmem>>, %arg6: memref<2x1x128xf32, #tpu.memory_space<vmem>>, %arg7: memref<2x64x128xf32, #tpu.memory_space<vmem>>) attributes {dimension_semantics = [#tpu.dimension_semantics<parallel>, #tpu.dimension_semantics<parallel>, #tpu.dimension_semantics<arbitrary>], iteration_bounds = array<i64: 2, 1, 1>, scalar_prefetch = 0 : i64, scratch_operands = 3 : i64, tpu.core_type = #tpu.core_type<tc>, window_params = [{transform_indices = @transform_0, window_bounds = array<i64: 1, 384, 128>}, {transform_indices = @transform_1, window_bounds = array<i64: 1, 128, 128>}]} {
    %c0 = arith.constant 0 : index
    %c0_0 = arith.constant 0 : index
    %c0_1 = arith.constant 0 : index
    %0 = vector.load %arg3[%c0, %c0_0, %c0_1] : memref<1x384x128xf32, #tpu.memory_space<vmem>>, vector<1x384x128xf32>
    %1 = vector.shape_cast %0 : vector<1x384x128xf32> to vector<384x128xf32>
    %2 = vector.shape_cast %1 : vector<384x128xf32> to vector<2x192x128xf32>
    %3 = vector.extract_strided_slice %2 {offsets = [0, 0, 0], sizes = [2, 64, 128], strides = [1, 1, 1]} : vector<2x192x128xf32> to vector<2x64x128xf32>
    %cst = arith.constant 1.250000e-01 : f32
    %4 = vector.broadcast %cst : f32 to vector<2x64x128xf32>
    %5 = arith.mulf %3, %4 : vector<2x64x128xf32>
    %c0_i32 = arith.constant 0 : i32
    %6 = arith.cmpi eq, %arg2, %c0_i32 : i32
    %7 = arith.extui %6 : i1 to i32
    %c0_i32_2 = arith.constant 0 : i32
    %8 = arith.cmpi ne, %7, %c0_i32_2 : i32
    scf.if %8 {
      %cst_30 = arith.constant 0xFF800000 : f32
      %40 = vector.broadcast %cst_30 : f32 to vector<2x1x128xf32>
      %c0_31 = arith.constant 0 : index
      %c0_32 = arith.constant 0 : index
      %c0_33 = arith.constant 0 : index
      %41 = vector.load %arg5[%c0_31, %c0_32, %c0_33] : memref<2x1x128xf32, #tpu.memory_space<vmem>>, vector<2x1x128xf32>
      tpu.vector_store %arg5[%c0_31, %c0_32, %c0_33], %40 {strides = array<i32>} : memref<2x1x128xf32, #tpu.memory_space<vmem>>, vector<2x1x128xf32>,
      %cst_34 = arith.constant 0.000000e+00 : f32
      %42 = vector.broadcast %cst_34 : f32 to vector<2x1x128xf32>
      %c0_35 = arith.constant 0 : index
      %c0_36 = arith.constant 0 : index
      %c0_37 = arith.constant 0 : index
      %43 = vector.load %arg6[%c0_35, %c0_36, %c0_37] : memref<2x1x128xf32, #tpu.memory_space<vmem>>, vector<2x1x128xf32>
      tpu.vector_store %arg6[%c0_35, %c0_36, %c0_37], %42 {strides = array<i32>} : memref<2x1x128xf32, #tpu.memory_space<vmem>>, vector<2x1x128xf32>,
      %cst_38 = arith.constant 0.000000e+00 : f32
      %44 = vector.broadcast %cst_38 : f32 to vector<2x64x128xf32>
      %c0_39 = arith.constant 0 : index
      %c0_40 = arith.constant 0 : index
      %c0_41 = arith.constant 0 : index
      %45 = vector.load %arg7[%c0_39, %c0_40, %c0_41] : memref<2x64x128xf32, #tpu.memory_space<vmem>>, vector<2x64x128xf32>
      tpu.vector_store %arg7[%c0_39, %c0_40, %c0_41], %44 {strides = array<i32>} : memref<2x64x128xf32, #tpu.memory_space<vmem>>, vector<2x64x128xf32>,
    } else {
    }
    %c0_3 = arith.constant 0 : index
    %c0_4 = arith.constant 0 : index
    %c0_5 = arith.constant 0 : index
    %9 = vector.load %arg3[%c0_3, %c0_4, %c0_5] : memref<1x384x128xf32, #tpu.memory_space<vmem>>, vector<1x384x128xf32>
    %10 = vector.shape_cast %9 : vector<1x384x128xf32> to vector<384x128xf32>
    %11 = vector.shape_cast %10 : vector<384x128xf32> to vector<2x192x128xf32>
    %12 = vector.extract_strided_slice %11 {offsets = [0, 64, 0], sizes = [2, 64, 128], strides = [1, 1, 1]} : vector<2x192x128xf32> to vector<2x64x128xf32>
    %13 = vector.extract_strided_slice %11 {offsets = [0, 128, 0], sizes = [2, 64, 128], strides = [1, 1, 1]} : vector<2x192x128xf32> to vector<2x64x128xf32>
    %cst_6 = arith.constant dense<0.000000e+00> : vector<2x128x128xf32>
    %14 = tpu.matmul %12, %5, %cst_6 {dimension_numbers = #tpu.dot_dimension_numbers<[1], [1], [2], [2], [0, 0, 0, 2, 1, 2], [0], [0]>} : vector<2x64x128xf32>, vector<2x64x128xf32>, vector<2x128x128xf32> -> vector<2x128x128xf32>
    %c0_7 = arith.constant 0 : index
    %c0_8 = arith.constant 0 : index
    %c0_9 = arith.constant 0 : index
    %15 = vector.load %arg5[%c0_7, %c0_8, %c0_9] : memref<2x1x128xf32, #tpu.memory_space<vmem>>, vector<2x1x128xf32>
    %cst_10 = arith.constant dense<0xFF800000> : vector<2x128xf32>
    %16 = vector.multi_reduction <maximumf>, %14, %cst_10 [1] : vector<2x128x128xf32> to vector<2x128xf32>
    %17 = vector.shape_cast %16 : vector<2x128xf32> to vector<2x1x128xf32>
    %18 = arith.maximumf %15, %17 : vector<2x1x128xf32>
    %19 = arith.subf %15, %18 : vector<2x1x128xf32>
    %20 = math.exp %19 : vector<2x1x128xf32>
    %21 = vector.broadcast %18 : vector<2x1x128xf32> to vector<2x128x128xf32>
    %22 = arith.subf %14, %21 : vector<2x128x128xf32>
    %23 = math.exp %22 : vector<2x128x128xf32>
    %c0_11 = arith.constant 0 : index
    %c0_12 = arith.constant 0 : index
    %c0_13 = arith.constant 0 : index
    %24 = vector.load %arg6[%c0_11, %c0_12, %c0_13] : memref<2x1x128xf32, #tpu.memory_space<vmem>>, vector<2x1x128xf32>
    %25 = arith.mulf %20, %24 : vector<2x1x128xf32>
    %cst_14 = arith.constant dense<0.000000e+00> : vector<2x128xf32>
    %26 = vector.multi_reduction <add>, %23, %cst_14 [1] : vector<2x128x128xf32> to vector<2x128xf32>
    %27 = vector.shape_cast %26 : vector<2x128xf32> to vector<2x1x128xf32>
    %28 = arith.addf %25, %27 : vector<2x1x128xf32>
    %c0_15 = arith.constant 0 : index
    %c0_16 = arith.constant 0 : index
    %c0_17 = arith.constant 0 : index
    %29 = vector.load %arg6[%c0_15, %c0_16, %c0_17] : memref<2x1x128xf32, #tpu.memory_space<vmem>>, vector<2x1x128xf32>
    tpu.vector_store %arg6[%c0_15, %c0_16, %c0_17], %28 {strides = array<i32>} : memref<2x1x128xf32, #tpu.memory_space<vmem>>, vector<2x1x128xf32>,
    %cst_18 = arith.constant dense<0.000000e+00> : vector<2x64x128xf32>
    %30 = tpu.matmul %13, %23, %cst_18 {dimension_numbers = #tpu.dot_dimension_numbers<[2], [1], [1], [2], [0, 0, 0, 1, 1, 2], [0], [0]>} : vector<2x64x128xf32>, vector<2x128x128xf32>, vector<2x64x128xf32> -> vector<2x64x128xf32>
    %c0_19 = arith.constant 0 : index
    %c0_20 = arith.constant 0 : index
    %c0_21 = arith.constant 0 : index
    %31 = vector.load %arg7[%c0_19, %c0_20, %c0_21] : memref<2x64x128xf32, #tpu.memory_space<vmem>>, vector<2x64x128xf32>
    %32 = vector.broadcast %20 : vector<2x1x128xf32> to vector<2x64x128xf32>
    %33 = arith.mulf %32, %31 : vector<2x64x128xf32>
    %34 = arith.addf %33, %30 : vector<2x64x128xf32>
    %c0_22 = arith.constant 0 : index
    %c0_23 = arith.constant 0 : index
    %c0_24 = arith.constant 0 : index
    %35 = vector.load %arg7[%c0_22, %c0_23, %c0_24] : memref<2x64x128xf32, #tpu.memory_space<vmem>>, vector<2x64x128xf32>
    tpu.vector_store %arg7[%c0_22, %c0_23, %c0_24], %34 {strides = array<i32>} : memref<2x64x128xf32, #tpu.memory_space<vmem>>, vector<2x64x128xf32>,
    %c0_25 = arith.constant 0 : index
    %c0_26 = arith.constant 0 : index
    %c0_27 = arith.constant 0 : index
    %36 = vector.load %arg5[%c0_25, %c0_26, %c0_27] : memref<2x1x128xf32, #tpu.memory_space<vmem>>, vector<2x1x128xf32>
    tpu.vector_store %arg5[%c0_25, %c0_26, %c0_27], %18 {strides = array<i32>} : memref<2x1x128xf32, #tpu.memory_space<vmem>>, vector<2x1x128xf32>,
    %c0_i32_28 = arith.constant 0 : i32
    %37 = arith.cmpi eq, %arg2, %c0_i32_28 : i32
    %38 = arith.extui %37 : i1 to i32
    %c0_i32_29 = arith.constant 0 : i32
    %39 = arith.cmpi ne, %38, %c0_i32_29 : i32
    scf.if %39 {
      %c0_30 = arith.constant 0 : index
      %c0_31 = arith.constant 0 : index
      %c0_32 = arith.constant 0 : index
      %40 = vector.load %arg6[%c0_30, %c0_31, %c0_32] : memref<2x1x128xf32, #tpu.memory_space<vmem>>, vector<2x1x128xf32>
      %41 = tpu.reciprocal %40 {approx = true} : vector<2x1x128xf32> -> vector<2x1x128xf32>
      %42 = arith.mulf %40, %41 : vector<2x1x128xf32>
      %cst_33 = arith.constant 2.000000e+00 : f32
      %43 = vector.broadcast %cst_33 : f32 to vector<2x1x128xf32>
      %44 = arith.subf %43, %42 : vector<2x1x128xf32>
      %45 = arith.mulf %41, %44 : vector<2x1x128xf32>
      %c0_34 = arith.constant 0 : index
      %c0_35 = arith.constant 0 : index
      %c0_36 = arith.constant 0 : index
      %46 = vector.load %arg7[%c0_34, %c0_35, %c0_36] : memref<2x64x128xf32, #tpu.memory_space<vmem>>, vector<2x64x128xf32>
      %47 = vector.broadcast %45 : vector<2x1x128xf32> to vector<2x64x128xf32>
      %48 = arith.mulf %46, %47 : vector<2x64x128xf32>
      %49 = vector.shape_cast %48 : vector<2x64x128xf32> to vector<128x128xf32>
      %c0_37 = arith.constant 0 : index
      %c0_38 = arith.constant 0 : index
      %c0_39 = arith.constant 0 : index
      %50 = vector.load %arg4[%c0_37, %c0_38, %c0_39] : memref<1x128x128xf32, #tpu.memory_space<vmem>>, vector<1x128x128xf32>
      %51 = vector.shape_cast %50 : vector<1x128x128xf32> to vector<128x128xf32>
      %52 = vector.shape_cast %49 : vector<128x128xf32> to vector<1x128x128xf32>
      tpu.vector_store %arg4[%c0_37, %c0_38, %c0_39], %52 {strides = array<i32>} : memref<1x128x128xf32, #tpu.memory_space<vmem>>, vector<1x128x128xf32>,
    } else {
    }
    return
  }
  func.func @transform_0(%arg0: i32, %arg1: i32, %arg2: i32) -> (i32, i32, i32) {
    %c0_i32 = arith.constant 0 : i32
    %c0_i32_0 = arith.constant 0 : i32
    return %arg0, %c0_i32, %arg1 : i32, i32, i32
  }
  func.func @transform_1(%arg0: i32, %arg1: i32, %arg2: i32) -> (i32, i32, i32) {
    %c0_i32 = arith.constant 0 : i32
    %c0_i32_0 = arith.constant 0 : i32
    return %arg0, %c0_i32, %arg1 : i32, i32, i32
  }
}

</mosaic_0001>

<llo_original>
// kernel: tpu_custom_call.1
$region0: #{tpu_custom_call.1}
  #allocation0 [shape = 'u32[]', space=smem, size = 0x4, offset = 0x4, fixed_abs, tag = 'smem constant byte address 0x4 - core index']
  #allocation1 [shape = 'u32[144,128]{1,0:T(1,128)}', space=vmem, size = 0x12000, scoped, tag = 'internal scratch']
  #allocation2 [shape = 'f32[2,1,128]{2,1,0:T(1,128)}', space=vmem, size = 0x400, scoped, tag = 'scratch operand']
  #allocation3 [shape = 'f32[2,1,128]{2,1,0:T(1,128)}', space=vmem, size = 0x400, scoped, tag = 'scratch operand']
  #allocation4 [shape = 'f32[2,64,128]{2,1,0:T(8,128)}', space=vmem, size = 0x10000, scoped, tag = 'scratch operand']
  %s0 = inlined_call_operand.hbm [shape: f32[2,384,128], index: 0, kind: input, shape index: {}]
  %s1 = inlined_call_operand.hbm [shape: f32[2,128,128], index: 1, kind: output, shape index: {}]
  %s2 = sld [smem:[#allocation0]]
  $region49: #{tpu_custom_call.1} parent=0
    _
  %s4 = ssub.s32 1, %s2
  %s5 = scalar_select 0, %s4, %s2
  $region1: #{tpu_custom_call.1} parent=0
    #allocation5 [shape = 'u8[393216]{0}', space=vmem, size = 0x60000, scoped, tag = 'input window, operand 0']
    #allocation6 [shape = 's32[2]{0}', space=sflag, size = 0x8, scoped, tag = 'scoped memory for tpu_custom_call.1']
    #allocation7 [shape = 's32[2]{0}', space=sflag, size = 0x8, scoped, tag = 'scoped memory for tpu_custom_call.1']
    #allocation8 [shape = 'u8[131072]{0}', space=vmem, size = 0x20000, scoped, tag = 'output window, operand 0']
    %6 = vsyncpa [#allocation6], 0
    %s7 = scalar_lea.sflag [#allocation6], 1
    %8 = vsyncpa %s7, 0
    %9 = vsyncpa [#allocation7], 0
    %s10 = scalar_lea.sflag [#allocation7], 1
    %11 = vsyncpa %s10, 0
    loop: start=0, step=1, limit=4
    $region2: #{tpu_custom_call.1} parent=1 // loop_pre_header
      _
    $region3: #{tpu_custom_call.1} parent=1 // loop_header
      %s13 = sphi 0, %s17
      %p14 = scmp.ge.s32.totalorder %s13, 4
      %s20 = sphi 0, %s39
      %s21 = sphi 0, %s35
      %s22 = sphi 0, %s31
      %s23 = sphi 0, %s20
      %s24 = sphi 0, %s21
      %s25 = sphi 0, %s22
      %s26 = sphi 0, %s23
      %s27 = sphi 0, %s24
      %s28 = sphi 0, %s25
      %s44 = sphi 0, %s46
      %s47 = sphi 0, %s44
      %s48 = sphi 0, %s47
      %s64 = sphi 0, %s48
      %s72 = sphi 0, %s74
      %s75 = sphi 0, %s72
      %s76 = sphi 0, %s75
      %s92 = sphi 0, %s76
    $region4: #{tpu_custom_call.1} parent=1 // loop_header_branch
      %16 = sbr.rel (%p14) target = $region8
    $region5: #{tpu_custom_call.1} parent=1 // loop_body
      %s18 = ssub.s32 %s13, 1
      %s19 = ssub.s32 %s13, 2
      %s29 = sadd.s32 1, %s22
      %p30 = scmp.ge.s32.totalorder %s29, 1
      %s31 = scalar_select %p30, 0, %s29
      %s32 = sadd.s32 1, %s21
      %s33 = scalar_select %p30, %s32, %s21
      %p34 = scmp.ge.s32.totalorder %s33, 1
      %s35 = scalar_select %p34, 0, %s33
      %s36 = sadd.s32 1, %s20
      %s37 = scalar_select %p34, %s36, %s20
      %p38 = scmp.ge.s32.totalorder %s37, 2
      %s39 = scalar_select %p38, 0, %s37
      %s40 = ssub.s32 %s20, %s39
      %s41 = ssub.s32 %s21, %s35
      %s42 = sor.u32 %s40, %s41
      %p43 = scmp.eq.s32.totalorder %s42, 0
      %s45 = sadd.s32 %s44, 1
      %s46 = scalar_select %p43, %s44, %s45
      %p49 = pneg %p43
      %p50 = scmp.eq.s32.totalorder %s13, 1
      %p51 = por %p49, %p50
      %p52 = scmp.ne.s32.totalorder %s44, %s47
      %p53 = scmp.eq.s32.totalorder %s13, 0
      %p54 = por %p52, %p53
      %p55 = scmp.ne.s32.totalorder %s44, %s47
      %p56 = scmp.eq.s32.totalorder %s18, 1
      %p57 = por %p55, %p56
      %p58 = scmp.ne.s32.totalorder %s47, %s48
      %p59 = scmp.eq.s32.totalorder %s18, 0
      %p60 = por %p58, %p59
      %p61 = scmp.ne.s32.totalorder %s47, %s48
      %p62 = scmp.eq.s32.totalorder %s19, 1
      %p63 = por %p61, %p62
      %p65 = scmp.ne.s32.totalorder %s48, %s64
      %p66 = scmp.eq.s32.totalorder %s19, 0
      %p67 = por %p65, %p66
      %s68 = ssub.s32 %s20, %s39
      %s69 = ssub.s32 %s21, %s35
      %s70 = sor.u32 %s68, %s69
      %p71 = scmp.eq.s32.totalorder %s70, 0
      %s73 = sadd.s32 %s72, 1
      %s74 = scalar_select %p71, %s72, %s73
      %p77 = pneg %p71
      %p78 = scmp.eq.s32.totalorder %s13, 1
      %p79 = por %p77, %p78
      %p80 = scmp.ne.s32.totalorder %s72, %s75
      %p81 = scmp.eq.s32.totalorder %s13, 0
      %p82 = por %p80, %p81
      %p83 = scmp.ne.s32.totalorder %s72, %s75
      %p84 = scmp.eq.s32.totalorder %s18, 1
      %p85 = por %p83, %p84
      %p86 = scmp.ne.s32.totalorder %s75, %s76
      %p87 = scmp.eq.s32.totalorder %s18, 0
      %p88 = por %p86, %p87
      %p89 = scmp.ne.s32.totalorder %s75, %s76
      %p90 = scmp.eq.s32.totalorder %s19, 1
      %p91 = por %p89, %p90
      %p93 = scmp.ne.s32.totalorder %s76, %s92
      %p94 = scmp.eq.s32.totalorder %s19, 0
      %p95 = por %p93, %p94
      %p96 = scmp.le.s32.totalorder 1, %s13
      %p97 = scmp.lt.s32.totalorder %s13, 3
      %p98 = pnand %p96, %p97
      %p99 = pneg %p98
      // Predicated region
      $region9: #{tpu_custom_call.1} parent=5 // pred_check
        _
      $region10: #{tpu_custom_call.1} parent=5 // pred_check_branch
        %101 = sbr.rel (%p98) target = $region12
      $region11: #{tpu_custom_call.1} parent=5 // pred_region
        %s102 = ssub.s32 %s13, 1
      $region12: #{tpu_custom_call.1} parent=5 // pred_fallthru
        _
      %p103 = scmp.lt.s32.totalorder %s13, 2
      // Predicated region
      $region13: #{tpu_custom_call.1} parent=5 // pred_check
        %p104 = pneg %p103
      $region14: #{tpu_custom_call.1} parent=5 // pred_check_branch
        %106 = sbr.rel (%p104) target = $region16
      $region15: #{tpu_custom_call.1} parent=5 // pred_region
        // Predicated region
        $region17: #{tpu_custom_call.1} parent=15 // pred_check
          %p107 = pneg %p54
        $region18: #{tpu_custom_call.1} parent=15 // pred_check_branch
          %109 = sbr.rel (%p107) target = $region20
        $region19: #{tpu_custom_call.1} parent=15 // pred_region
          %s110 = sand.u32 %s44, 1
          %s111 = scalar_lea.sflag [#allocation6], %s110
          %s112 = sand.u32 %s44, 1
          %s113 = smul.addr %s112, 384
          %s114 = scalar_lea.vmem [#allocation5], %s113
          %s116 = ssub.s32 6144, 6144
          %117 = vsyncadd %s111, %s116
          %s118 = smul.addr %s20, 48
          %s119 = sadd.s32 %s21, %s118
          %s120 = smul.addr %s119, 128
          %s121 = scalar_lea.hbm %s0, %s120
          %s122 = sshll.u32 %s114, 4
          %s123 = int_to_ptr.vmem [resolvable:$true] %s122
          %128 = dma.hbm_to_vmem [thread:$0]  %s121, 6144, %s123, %s111, 128, 128, 8
        $region20: #{tpu_custom_call.1} parent=15 // pred_fallthru
          _
      $region16: #{tpu_custom_call.1} parent=5 // pred_fallthru
        _
      %p129 = scmp.le.s32.totalorder 1, %s13
      %p130 = scmp.lt.s32.totalorder %s13, 3
      %p131 = pnand %p129, %p130
      %p132 = pneg %p131
      // Predicated region
      $region21: #{tpu_custom_call.1} parent=5 // pred_check
        _
      $region22: #{tpu_custom_call.1} parent=5 // pred_check_branch
        %134 = sbr.rel (%p131) target = $region24
      $region23: #{tpu_custom_call.1} parent=5 // pred_region
        %s135 = ssub.s32 %s13, 1
        %s136 = sand.u32 %s47, 1
        %s137 = scalar_lea.sflag [#allocation6], %s136
        %s138 = sand.u32 %s47, 1
        %s139 = smul.addr %s138, 384
        %s140 = scalar_lea.vmem [#allocation5], %s139
        // Predicated region
        $region25: #{tpu_custom_call.1} parent=23 // pred_check
          %p141 = pneg %p60
        $region26: #{tpu_custom_call.1} parent=23 // pred_check_branch
          %143 = sbr.rel (%p141) target = $region28
        $region27: #{tpu_custom_call.1} parent=23 // pred_region
          %144 = dma.done %s137, 6144
        $region28: #{tpu_custom_call.1} parent=23 // pred_fallthru
          _
        %s145 = sand.u32 %s47, 1
        %s146 = scalar_lea.sflag [#allocation6], %s145
        %s147 = sand.u32 %s47, 1
        %s148 = smul.addr %s147, 384
        %s149 = scalar_lea.vmem [#allocation5], %s148
        %p150 = pneg %p60
        %p151 = pneg %p57
        %p152 = pneg %p88
        %p153 = pneg %p85
        %s154 = sand.u32 %s75, 1
        %s155 = scalar_lea.sflag [#allocation7], %s154
        %s156 = sand.u32 %s75, 1
        %s157 = smul.addr %s156, 128
        %s158 = scalar_lea.vmem [#allocation8], %s157
        %v159 = vld [vmem:[%s140] sm:$0xff]
        %v160 = vld [vmem:[%s140 + $0x8] sm:$0xff]
        %v161 = vld [vmem:[%s140 + $0x10] sm:$0xff]
        %v162 = vld [vmem:[%s140 + $0x18] sm:$0xff]
        %v163 = vld [vmem:[%s140 + $0x20] sm:$0xff]
        %v164 = vld [vmem:[%s140 + $0x28] sm:$0xff]
        %v165 = vld [vmem:[%s140 + $0x30] sm:$0xff]
        %v166 = vld [vmem:[%s140 + $0x38] sm:$0xff]
        %v167 = vld [vmem:[%s140 + $0xc0] sm:$0xff]
        %v168 = vld [vmem:[%s140 + $0xc8] sm:$0xff]
        %v169 = vld [vmem:[%s140 + $0xd0] sm:$0xff]
        %v170 = vld [vmem:[%s140 + $0xd8] sm:$0xff]
        %v171 = vld [vmem:[%s140 + $0xe0] sm:$0xff]
        %v172 = vld [vmem:[%s140 + $0xe8] sm:$0xff]
        %v173 = vld [vmem:[%s140 + $0xf0] sm:$0xff]
        %v174 = vld [vmem:[%s140 + $0xf8] sm:$0xff]
        %v175 = vmul.f32 %v159, 0.125
        %v176 = vmul.f32 %v160, 0.125
        %v177 = vmul.f32 %v161, 0.125
        %v178 = vmul.f32 %v162, 0.125
        %v179 = vmul.f32 %v163, 0.125
        %v180 = vmul.f32 %v164, 0.125
        %v181 = vmul.f32 %v165, 0.125
        %v182 = vmul.f32 %v166, 0.125
        %v183 = vmul.f32 %v167, 0.125
        %v184 = vmul.f32 %v168, 0.125
        %v185 = vmul.f32 %v169, 0.125
        %v186 = vmul.f32 %v170, 0.125
        %v187 = vmul.f32 %v171, 0.125
        %v188 = vmul.f32 %v172, 0.125
        %v189 = vmul.f32 %v173, 0.125
        %v190 = vmul.f32 %v174, 0.125
        %p191 = scmp.eq.s32.totalorder %s25, 0
        // Predicated region
        $region29: #{tpu_custom_call.1} parent=23 // pred_check
          %p192 = pneg %p191
        $region30: #{tpu_custom_call.1} parent=23 // pred_check_branch
          %194 = sbr.rel (%p192) target = $region32
        $region31: #{tpu_custom_call.1} parent=23 // pred_region
          %195 = vst [vmem:[#allocation2] sm:$0x1] -inf
          %196 = vst [vmem:[#allocation2 + $0x1] sm:$0x1] -inf
          %197 = vst [vmem:[#allocation3] sm:$0x1] 0.0
          %198 = vst [vmem:[#allocation3 + $0x1] sm:$0x1] 0.0
          %199 = vst [vmem:[#allocation4] sm:$0xff] 0.0
          %200 = vst [vmem:[#allocation4 + $0x8] sm:$0xff] 0.0
          %201 = vst [vmem:[#allocation4 + $0x10] sm:$0xff] 0.0
          %202 = vst [vmem:[#allocation4 + $0x18] sm:$0xff] 0.0
          %203 = vst [vmem:[#allocation4 + $0x20] sm:$0xff] 0.0
          %204 = vst [vmem:[#allocation4 + $0x28] sm:$0xff] 0.0
          %205 = vst [vmem:[#allocation4 + $0x30] sm:$0xff] 0.0
          %206 = vst [vmem:[#allocation4 + $0x38] sm:$0xff] 0.0
          %207 = vst [vmem:[#allocation4 + $0x40] sm:$0xff] 0.0
          %208 = vst [vmem:[#allocation4 + $0x48] sm:$0xff] 0.0
          %209 = vst [vmem:[#allocation4 + $0x50] sm:$0xff] 0.0
          %210 = vst [vmem:[#allocation4 + $0x58] sm:$0xff] 0.0
          %211 = vst [vmem:[#allocation4 + $0x60] sm:$0xff] 0.0
          %212 = vst [vmem:[#allocation4 + $0x68] sm:$0xff] 0.0
          %213 = vst [vmem:[#allocation4 + $0x70] sm:$0xff] 0.0
          %214 = vst [vmem:[#allocation4 + $0x78] sm:$0xff] 0.0
        $region32: #{tpu_custom_call.1} parent=23 // pred_fallthru
          _
        %v215 = vld [vmem:[%s140 + $0x40] sm:$0xff]
        %v216 = vld [vmem:[%s140 + $0x48] sm:$0xff]
        %v217 = vld [vmem:[%s140 + $0x50] sm:$0xff]
        %v218 = vld [vmem:[%s140 + $0x58] sm:$0xff]
        %v219 = vld [vmem:[%s140 + $0x60] sm:$0xff]
        %v220 = vld [vmem:[%s140 + $0x68] sm:$0xff]
        %v221 = vld [vmem:[%s140 + $0x70] sm:$0xff]
        %v222 = vld [vmem:[%s140 + $0x78] sm:$0xff]
        %v223 = vld [vmem:[%s140 + $0x80] sm:$0xff]
        %v224 = vld [vmem:[%s140 + $0x88] sm:$0xff]
        %v225 = vld [vmem:[%s140 + $0x90] sm:$0xff]
        %v226 = vld [vmem:[%s140 + $0x98] sm:$0xff]
        %v227 = vld [vmem:[%s140 + $0xa0] sm:$0xff]
        %v228 = vld [vmem:[%s140 + $0xa8] sm:$0xff]
        %v229 = vld [vmem:[%s140 + $0xb0] sm:$0xff]
        %v230 = vld [vmem:[%s140 + $0xb8] sm:$0xff]
        %v231 = vld [vmem:[%s140 + $0x100] sm:$0xff]
        %v232 = vld [vmem:[%s140 + $0x108] sm:$0xff]
        %v233 = vld [vmem:[%s140 + $0x110] sm:$0xff]
        %v234 = vld [vmem:[%s140 + $0x118] sm:$0xff]
        %v235 = vld [vmem:[%s140 + $0x120] sm:$0xff]
        %v236 = vld [vmem:[%s140 + $0x128] sm:$0xff]
        %v237 = vld [vmem:[%s140 + $0x130] sm:$0xff]
        %v238 = vld [vmem:[%s140 + $0x138] sm:$0xff]
        %v239 = vld [vmem:[%s140 + $0x140] sm:$0xff]
        %v240 = vld [vmem:[%s140 + $0x148] sm:$0xff]
        %v241 = vld [vmem:[%s140 + $0x150] sm:$0xff]
        %v242 = vld [vmem:[%s140 + $0x158] sm:$0xff]
        %v243 = vld [vmem:[%s140 + $0x160] sm:$0xff]
        %v244 = vld [vmem:[%s140 + $0x168] sm:$0xff]
        %v245 = vld [vmem:[%s140 + $0x170] sm:$0xff]
        %v246 = vld [vmem:[%s140 + $0x178] sm:$0xff]
        %247 = vxpose.xlu0.b32.start [1/16] %v215, 128
        %248 = vxpose.xlu0.b32.cont [2/16] %v216, 128
        %249 = vxpose.xlu0.b32.cont [3/16] %v217, 128
        %250 = vxpose.xlu0.b32.cont [4/16] %v218, 128
        %251 = vxpose.xlu0.b32.cont [5/16] %v219, 128
        %252 = vxpose.xlu0.b32.cont [6/16] %v220, 128
        %253 = vxpose.xlu0.b32.cont [7/16] %v221, 128
        %254 = vxpose.xlu0.b32.cont [8/16] %v222, 128
        %255 = vxpose.xlu0.b32.cont [9/16] 0.0, 128
        %256 = vxpose.xlu0.b32.cont [10/16] 0.0, 128
        %257 = vxpose.xlu0.b32.cont [11/16] 0.0, 128
        %258 = vxpose.xlu0.b32.cont [12/16] 0.0, 128
        %259 = vxpose.xlu0.b32.cont [13/16] 0.0, 128
        %260 = vxpose.xlu0.b32.cont [14/16] 0.0, 128
        %261 = vxpose.xlu0.b32.cont [15/16] 0.0, 128
        %262 = vxpose.xlu0.b32.end [16/16] 0.0, 128
        %v263 = vpop.trf.xlu0
        %v264 = vpop.trf.xlu0
        %v265 = vpop.trf.xlu0
        %v266 = vpop.trf.xlu0
        %v267 = vpop.trf.xlu0
        %v268 = vpop.trf.xlu0
        %v269 = vpop.trf.xlu0
        %v270 = vpop.trf.xlu0
        %v271 = vpop.trf.xlu0
        %v272 = vpop.trf.xlu0
        %v273 = vpop.trf.xlu0
        %v274 = vpop.trf.xlu0
        %v275 = vpop.trf.xlu0
        %v276 = vpop.trf.xlu0
        %v277 = vpop.trf.xlu0
        %v278 = vpop.trf.xlu0
        %vm279 = vcmask 523264
        %v281 = vsel %vm279, %v263, 0
        %v284 = vsel %vm279, %v264, 0
        %v287 = vsel %vm279, %v265, 0
        %v290 = vsel %vm279, %v266, 0
        %v293 = vsel %vm279, %v267, 0
        %v296 = vsel %vm279, %v268, 0
        %v299 = vsel %vm279, %v269, 0
        %v302 = vsel %vm279, %v270, 0
        %v305 = vsel %vm279, %v271, 0
        %v308 = vsel %vm279, %v272, 0
        %v311 = vsel %vm279, %v273, 0
        %v314 = vsel %vm279, %v274, 0
        %v317 = vsel %vm279, %v275, 0
        %v320 = vsel %vm279, %v276, 0
        %v323 = vsel %vm279, %v277, 0
        %v326 = vsel %vm279, %v278, 0
        %328 = vmatprep.subr.mxu0 0.0
        %329 = vmatpush1.msra.mxu0 %v175
        %330 = vmatprep.subr.mxu0 0.0
        %331 = vmatpush1.msra.mxu0 %v176
        %332 = vmatprep.subr.mxu0 0.0
        %333 = vmatpush1.msra.mxu0 %v177
        %334 = vmatprep.subr.mxu0 0.0
        %335 = vmatpush1.msra.mxu0 %v178
        %336 = vmatprep.subr.mxu0 0.0
        %337 = vmatpush1.msra.mxu0 %v179
        %338 = vmatprep.subr.mxu0 0.0
        %339 = vmatpush1.msra.mxu0 %v180
        %340 = vmatprep.subr.mxu0 0.0
        %341 = vmatpush1.msra.mxu0 %v181
        %342 = vmatprep.subr.mxu0 0.0
        %343 = vmatpush1.msra.mxu0 %v182
        %344 = vmatprep.subr.mxu0 0.0
        %345 = vmatpush1.msra.mxu0 0.0
        %346 = vmatprep.subr.mxu0 0.0
        %347 = vmatpush1.msra.mxu0 0.0
        %348 = vmatprep.subr.mxu0 0.0
        %349 = vmatpush1.msra.mxu0 0.0
        %350 = vmatprep.subr.mxu0 0.0
        %351 = vmatpush1.msra.mxu0 0.0
        %352 = vmatprep.subr.mxu0 0.0
        %353 = vmatpush1.msra.mxu0 0.0
        %354 = vmatprep.subr.mxu0 0.0
        %355 = vmatpush1.msra.mxu0 0.0
        %356 = vmatprep.subr.mxu0 0.0
        %357 = vmatpush1.msra.mxu0 0.0
        %358 = vmatprep.subr.mxu0 0.0
        %359 = vmatpush1.msra.mxu0 0.0
        %360 = vmatprep.subr.mxu0 0.0
        %361 = vmatpush1.msra.mxu0 0.0
        %362 = vmatprep.subr.mxu0 0.0
        %363 = vmatpush1.msra.mxu0 0.0
        %364 = vmatprep.subr.mxu0 0.0
        %365 = vmatpush1.msra.mxu0 0.0
        %366 = vmatprep.subr.mxu0 0.0
        %367 = vmatpush1.msra.mxu0 0.0
        %368 = vmatprep.subr.mxu0 0.0
        %369 = vmatpush1.msra.mxu0 0.0
        %370 = vmatprep.subr.mxu0 0.0
        %371 = vmatpush1.msra.mxu0 0.0
        %372 = vmatprep.subr.mxu0 0.0
        %373 = vmatpush1.msra.mxu0 0.0
        %374 = vmatprep.subr.mxu0 0.0
        %375 = vmatpush1.msra.mxu0 0.0
        %376 = vmatprep.subr.mxu0 0.0
        %377 = vmatpush1.msra.mxu0 0.0
        %378 = vmatprep.subr.mxu0 0.0
        %379 = vmatpush1.msra.mxu0 0.0
        %380 = vmatprep.subr.mxu0 0.0
        %381 = vmatpush1.msra.mxu0 0.0
        %382 = vmatprep.subr.mxu0 0.0
        %383 = vmatpush1.msra.mxu0 0.0
        %384 = vmatprep.subr.mxu0 0.0
        %385 = vmatpush1.msra.mxu0 0.0
        %386 = vmatprep.subr.mxu0 0.0
        %387 = vmatpush1.msra.mxu0 0.0
        %388 = vmatprep.subr.mxu0 0.0
        %389 = vmatpush1.msra.mxu0 0.0
        %390 = vmatprep.subr.mxu0 0.0
        %391 = vmatpush1.msra.mxu0 0.0
        %392 = vmatprep.mubr.f32.mxu0 0.0
        %393 = vmatmul.mubr.f32.gmra.mrb[0].mxu0 %v281
        %v394 = vpop.f32.mrb[0].mxu0
        %v395 = vadd.f32 0.0, %v394
        %v396 = vpop.f32.mrb[0].mxu0
        %397 = vmatprep.mubr.f32.mxu0 0.0
        %398 = vmatmul.mubr.f32.gmra.mrb[0].mxu0 %v284
        %v399 = vpop.f32.mrb[0].mxu0
        %v400 = vadd.f32 0.0, %v399
        %v401 = vpop.f32.mrb[0].mxu0
        %402 = vmatprep.mubr.f32.mxu0 0.0
        %403 = vmatmul.mubr.f32.gmra.mrb[0].mxu0 %v287
        %v404 = vpop.f32.mrb[0].mxu0
        %v405 = vadd.f32 0.0, %v404
        %v406 = vpop.f32.mrb[0].mxu0
        %407 = vmatprep.mubr.f32.mxu0 0.0
        %408 = vmatmul.mubr.f32.gmra.mrb[0].mxu0 %v290
        %v409 = vpop.f32.mrb[0].mxu0
        %v410 = vadd.f32 0.0, %v409
        %v411 = vpop.f32.mrb[0].mxu0
        %412 = vmatprep.mubr.f32.mxu0 0.0
        %413 = vmatmul.mubr.f32.gmra.mrb[0].mxu0 %v293
        %v414 = vpop.f32.mrb[0].mxu0
        %v415 = vadd.f32 0.0, %v414
        %v416 = vpop.f32.mrb[0].mxu0
        %417 = vmatprep.mubr.f32.mxu0 0.0
        %418 = vmatmul.mubr.f32.gmra.mrb[0].mxu0 %v296
        %v419 = vpop.f32.mrb[0].mxu0
        %v420 = vadd.f32 0.0, %v419
        %v421 = vpop.f32.mrb[0].mxu0
        %422 = vmatprep.mubr.f32.mxu0 0.0
        %423 = vmatmul.mubr.f32.gmra.mrb[0].mxu0 %v299
        %v424 = vpop.f32.mrb[0].mxu0
        %v425 = vadd.f32 0.0, %v424
        %v426 = vpop.f32.mrb[0].mxu0
        %427 = vmatprep.mubr.f32.mxu0 0.0
        %428 = vmatmul.mubr.f32.gmra.mrb[0].mxu0 %v302
        %v429 = vpop.f32.mrb[0].mxu0
        %v430 = vadd.f32 0.0, %v429
        %v431 = vpop.f32.mrb[0].mxu0
        %432 = vmatprep.mubr.f32.mxu0 0.0
        %433 = vmatmul.mubr.f32.gmra.mrb[0].mxu0 %v305
        %v434 = vpop.f32.mrb[0].mxu0
        %v435 = vadd.f32 0.0, %v434
        %v436 = vpop.f32.mrb[0].mxu0
        %437 = vmatprep.mubr.f32.mxu0 0.0
        %438 = vmatmul.mubr.f32.gmra.mrb[0].mxu0 %v308
        %v439 = vpop.f32.mrb[0].mxu0
        %v440 = vadd.f32 0.0, %v439
        %v441 = vpop.f32.mrb[0].mxu0
        %442 = vmatprep.mubr.f32.mxu0 0.0
        %443 = vmatmul.mubr.f32.gmra.mrb[0].mxu0 %v311
        %v444 = vpop.f32.mrb[0].mxu0
        %v445 = vadd.f32 0.0, %v444
        %v446 = vpop.f32.mrb[0].mxu0
        %447 = vmatprep.mubr.f32.mxu0 0.0
        %448 = vmatmul.mubr.f32.gmra.mrb[0].mxu0 %v314
        %v449 = vpop.f32.mrb[0].mxu0
        %v450 = vadd.f32 0.0, %v449
        %v451 = vpop.f32.mrb[0].mxu0
        %452 = vmatprep.mubr.f32.mxu0 0.0
        %453 = vmatmul.mubr.f32.gmra.mrb[0].mxu0 %v317
        %v454 = vpop.f32.mrb[0].mxu0
        %v455 = vadd.f32 0.0, %v454
        %v456 = vpop.f32.mrb[0].mxu0
        %457 = vmatprep.mubr.f32.mxu0 0.0
        %458 = vmatmul.mubr.f32.gmra.mrb[0].mxu0 %v320
        %v459 = vpop.f32.mrb[0].mxu0
        %v460 = vadd.f32 0.0, %v459
        %v461 = vpop.f32.mrb[0].mxu0
        %462 = vmatprep.mubr.f32.mxu0 0.0
        %463 = vmatmul.mubr.f32.gmra.mrb[0].mxu0 %v323
        %v464 = vpop.f32.mrb[0].mxu0
        %v465 = vadd.f32 0.0, %v464
        %v466 = vpop.f32.mrb[0].mxu0
        %467 = vmatprep.mubr.f32.mxu0 0.0
        %468 = vmatmul.mubr.f32.gmra.mrb[0].mxu0 %v326
        %v469 = vpop.f32.mrb[0].mxu0
        %v470 = vadd.f32 0.0, %v469
        %v471 = vpop.f32.mrb[0].mxu0
        %472 = vdwg.mxu0
        %473 = vxpose.xlu0.b32.start [1/16] %v231, 128
        %474 = vxpose.xlu0.b32.cont [2/16] %v232, 128
        %475 = vxpose.xlu0.b32.cont [3/16] %v233, 128
        %476 = vxpose.xlu0.b32.cont [4/16] %v234, 128
        %477 = vxpose.xlu0.b32.cont [5/16] %v235, 128
        %478 = vxpose.xlu0.b32.cont [6/16] %v236, 128
        %479 = vxpose.xlu0.b32.cont [7/16] %v237, 128
        %480 = vxpose.xlu0.b32.cont [8/16] %v238, 128
        %481 = vxpose.xlu0.b32.cont [9/16] 0.0, 128
        %482 = vxpose.xlu0.b32.cont [10/16] 0.0, 128
        %483 = vxpose.xlu0.b32.cont [11/16] 0.0, 128
        %484 = vxpose.xlu0.b32.cont [12/16] 0.0, 128
        %485 = vxpose.xlu0.b32.cont [13/16] 0.0, 128
        %486 = vxpose.xlu0.b32.cont [14/16] 0.0, 128
        %487 = vxpose.xlu0.b32.cont [15/16] 0.0, 128
        %488 = vxpose.xlu0.b32.end [16/16] 0.0, 128
        %v489 = vpop.trf.xlu0
        %v490 = vpop.trf.xlu0
        %v491 = vpop.trf.xlu0
        %v492 = vpop.trf.xlu0
        %v493 = vpop.trf.xlu0
        %v494 = vpop.trf.xlu0
        %v495 = vpop.trf.xlu0
        %v496 = vpop.trf.xlu0
        %v497 = vpop.trf.xlu0
        %v498 = vpop.trf.xlu0
        %v499 = vpop.trf.xlu0
        %v500 = vpop.trf.xlu0
        %v501 = vpop.trf.xlu0
        %v502 = vpop.trf.xlu0
        %v503 = vpop.trf.xlu0
        %v504 = vpop.trf.xlu0
        %v506 = vsel %vm279, %v489, 0
        %v509 = vsel %vm279, %v490, 0
        %v512 = vsel %vm279, %v491, 0
        %v515 = vsel %vm279, %v492, 0
        %v518 = vsel %vm279, %v493, 0
        %v521 = vsel %vm279, %v494, 0
        %v524 = vsel %vm279, %v495, 0
        %v527 = vsel %vm279, %v496, 0
        %v530 = vsel %vm279, %v497, 0
        %v533 = vsel %vm279, %v498, 0
        %v536 = vsel %vm279, %v499, 0
        %v539 = vsel %vm279, %v500, 0
        %v542 = vsel %vm279, %v501, 0
        %v545 = vsel %vm279, %v502, 0
        %v548 = vsel %vm279, %v503, 0
        %v551 = vsel %vm279, %v504, 0
        %553 = vmatprep.subr.mxu0 0.0
        %554 = vmatpush1.msra.mxu0 %v183
        %555 = vmatprep.subr.mxu0 0.0
        %556 = vmatpush1.msra.mxu0 %v184
        %557 = vmatprep.subr.mxu0 0.0
        %558 = vmatpush1.msra.mxu0 %v185
        %559 = vmatprep.subr.mxu0 0.0
        %560 = vmatpush1.msra.mxu0 %v186
        %561 = vmatprep.subr.mxu0 0.0
        %562 = vmatpush1.msra.mxu0 %v187
        %563 = vmatprep.subr.mxu0 0.0
        %564 = vmatpush1.msra.mxu0 %v188
        %565 = vmatprep.subr.mxu0 0.0
        %566 = vmatpush1.msra.mxu0 %v189
        %567 = vmatprep.subr.mxu0 0.0
        %568 = vmatpush1.msra.mxu0 %v190
        %569 = vmatprep.subr.mxu0 0.0
        %570 = vmatpush1.msra.mxu0 0.0
        %571 = vmatprep.subr.mxu0 0.0
        %572 = vmatpush1.msra.mxu0 0.0
        %573 = vmatprep.subr.mxu0 0.0
        %574 = vmatpush1.msra.mxu0 0.0
        %575 = vmatprep.subr.mxu0 0.0
        %576 = vmatpush1.msra.mxu0 0.0
        %577 = vmatprep.subr.mxu0 0.0
        %578 = vmatpush1.msra.mxu0 0.0
        %579 = vmatprep.subr.mxu0 0.0
        %580 = vmatpush1.msra.mxu0 0.0
        %581 = vmatprep.subr.mxu0 0.0
        %582 = vmatpush1.msra.mxu0 0.0
        %583 = vmatprep.subr.mxu0 0.0
        %584 = vmatpush1.msra.mxu0 0.0
        %585 = vmatprep.subr.mxu0 0.0
        %586 = vmatpush1.msra.mxu0 0.0
        %587 = vmatprep.subr.mxu0 0.0
        %588 = vmatpush1.msra.mxu0 0.0
        %589 = vmatprep.subr.mxu0 0.0
        %590 = vmatpush1.msra.mxu0 0.0
        %591 = vmatprep.subr.mxu0 0.0
        %592 = vmatpush1.msra.mxu0 0.0
        %593 = vmatprep.subr.mxu0 0.0
        %594 = vmatpush1.msra.mxu0 0.0
        %595 = vmatprep.subr.mxu0 0.0
        %596 = vmatpush1.msra.mxu0 0.0
        %597 = vmatprep.subr.mxu0 0.0
        %598 = vmatpush1.msra.mxu0 0.0
        %599 = vmatprep.subr.mxu0 0.0
        %600 = vmatpush1.msra.mxu0 0.0
        %601 = vmatprep.subr.mxu0 0.0
        %602 = vmatpush1.msra.mxu0 0.0
        %603 = vmatprep.subr.mxu0 0.0
        %604 = vmatpush1.msra.mxu0 0.0
        %605 = vmatprep.subr.mxu0 0.0
        %606 = vmatpush1.msra.mxu0 0.0
        %607 = vmatprep.subr.mxu0 0.0
        %608 = vmatpush1.msra.mxu0 0.0
        %609 = vmatprep.subr.mxu0 0.0
        %610 = vmatpush1.msra.mxu0 0.0
        %611 = vmatprep.subr.mxu0 0.0
        %612 = vmatpush1.msra.mxu0 0.0
        %613 = vmatprep.subr.mxu0 0.0
        %614 = vmatpush1.msra.mxu0 0.0
        %615 = vmatprep.subr.mxu0 0.0
        %616 = vmatpush1.msra.mxu0 0.0
        %617 = vmatprep.mubr.f32.mxu0 0.0
        %618 = vmatmul.mubr.f32.gmra.mrb[0].mxu0 %v506
        %v619 = vpop.f32.mrb[0].mxu0
        %v620 = vadd.f32 0.0, %v619
        %v621 = vpop.f32.mrb[0].mxu0
        %622 = vmatprep.mubr.f32.mxu0 0.0
        %623 = vmatmul.mubr.f32.gmra.mrb[0].mxu0 %v509
        %v624 = vpop.f32.mrb[0].mxu0
        %v625 = vadd.f32 0.0, %v624
        %v626 = vpop.f32.mrb[0].mxu0
        %627 = vmatprep.mubr.f32.mxu0 0.0
        %628 = vmatmul.mubr.f32.gmra.mrb[0].mxu0 %v512
        %v629 = vpop.f32.mrb[0].mxu0
        %v630 = vadd.f32 0.0, %v629
        %v631 = vpop.f32.mrb[0].mxu0
        %632 = vmatprep.mubr.f32.mxu0 0.0
        %633 = vmatmul.mubr.f32.gmra.mrb[0].mxu0 %v515
        %v634 = vpop.f32.mrb[0].mxu0
        %v635 = vadd.f32 0.0, %v634
        %v636 = vpop.f32.mrb[0].mxu0
        %637 = vmatprep.mubr.f32.mxu0 0.0
        %638 = vmatmul.mubr.f32.gmra.mrb[0].mxu0 %v518
        %v639 = vpop.f32.mrb[0].mxu0
        %v640 = vadd.f32 0.0, %v639
        %v641 = vpop.f32.mrb[0].mxu0
        %642 = vmatprep.mubr.f32.mxu0 0.0
        %643 = vmatmul.mubr.f32.gmra.mrb[0].mxu0 %v521
        %v644 = vpop.f32.mrb[0].mxu0
        %v645 = vadd.f32 0.0, %v644
        %v646 = vpop.f32.mrb[0].mxu0
        %647 = vmatprep.mubr.f32.mxu0 0.0
        %648 = vmatmul.mubr.f32.gmra.mrb[0].mxu0 %v524
        %v649 = vpop.f32.mrb[0].mxu0
        %v650 = vadd.f32 0.0, %v649
        %v651 = vpop.f32.mrb[0].mxu0
        %652 = vmatprep.mubr.f32.mxu0 0.0
        %653 = vmatmul.mubr.f32.gmra.mrb[0].mxu0 %v527
        %v654 = vpop.f32.mrb[0].mxu0
        %v655 = vadd.f32 0.0, %v654
        %v656 = vpop.f32.mrb[0].mxu0
        %657 = vmatprep.mubr.f32.mxu0 0.0
        %658 = vmatmul.mubr.f32.gmra.mrb[0].mxu0 %v530
        %v659 = vpop.f32.mrb[0].mxu0
        %v660 = vadd.f32 0.0, %v659
        %v661 = vpop.f32.mrb[0].mxu0
        %662 = vmatprep.mubr.f32.mxu0 0.0
        %663 = vmatmul.mubr.f32.gmra.mrb[0].mxu0 %v533
        %v664 = vpop.f32.mrb[0].mxu0
        %v665 = vadd.f32 0.0, %v664
        %v666 = vpop.f32.mrb[0].mxu0
        %667 = vmatprep.mubr.f32.mxu0 0.0
        %668 = vmatmul.mubr.f32.gmra.mrb[0].mxu0 %v536
        %v669 = vpop.f32.mrb[0].mxu0
        %v670 = vadd.f32 0.0, %v669
        %v671 = vpop.f32.mrb[0].mxu0
        %672 = vmatprep.mubr.f32.mxu0 0.0
        %673 = vmatmul.mubr.f32.gmra.mrb[0].mxu0 %v539
        %v674 = vpop.f32.mrb[0].mxu0
        %v675 = vadd.f32 0.0, %v674
        %v676 = vpop.f32.mrb[0].mxu0
        %677 = vmatprep.mubr.f32.mxu0 0.0
        %678 = vmatmul.mubr.f32.gmra.mrb[0].mxu0 %v542
        %v679 = vpop.f32.mrb[0].mxu0
        %v680 = vadd.f32 0.0, %v679
        %v681 = vpop.f32.mrb[0].mxu0
        %682 = vmatprep.mubr.f32.mxu0 0.0
        %683 = vmatmul.mubr.f32.gmra.mrb[0].mxu0 %v545
        %v684 = vpop.f32.mrb[0].mxu0
        %v685 = vadd.f32 0.0, %v684
        %v686 = vpop.f32.mrb[0].mxu0
        %687 = vmatprep.mubr.f32.mxu0 0.0
        %688 = vmatmul.mubr.f32.gmra.mrb[0].mxu0 %v548
        %v689 = vpop.f32.mrb[0].mxu0
        %v690 = vadd.f32 0.0, %v689
        %v691 = vpop.f32.mrb[0].mxu0
        %692 = vmatprep.mubr.f32.mxu0 0.0
        %693 = vmatmul.mubr.f32.gmra.mrb[0].mxu0 %v551
        %v694 = vpop.f32.mrb[0].mxu0
        %v695 = vadd.f32 0.0, %v694
        %v696 = vpop.f32.mrb[0].mxu0
        %697 = vdwg.mxu0
        %v698 = vld [vmem:[#allocation2] sm:$0x1]
        %v699 = vld [vmem:[#allocation2 + $0x1] sm:$0x1]
        %v700 = vmax.f32 %v395, %v405
        %v701 = vmax.f32 %v400, %v410
        %v702 = vmax.f32 %v700, %v415
        %v703 = vmax.f32 %v701, %v420
        %v704 = vmax.f32 %v702, %v425
        %v705 = vmax.f32 %v703, %v430
        %v706 = vmax.f32 %v704, %v435
        %v707 = vmax.f32 %v705, %v440
        %v708 = vmax.f32 %v706, %v445
        %v709 = vmax.f32 %v707, %v450
        %v710 = vmax.f32 %v708, %v455
        %v711 = vmax.f32 %v709, %v460
        %v712 = vmax.f32 %v710, %v465
        %v713 = vmax.f32 %v711, %v470
        %v714 = vmax.f32 %v712, %v713
        %v715 = vrot.slane %v714, 4
        %v716 = vmax.f32 %v714, %v715
        %v717 = vrot.slane %v716, 2
        %v718 = vmax.f32 %v716, %v717
        %v719 = vrot.slane %v718, 1
        %v720 = vmax.f32 %v718, %v719
        %v721 = vmax.f32 %v620, %v630
        %v722 = vmax.f32 %v625, %v635
        %v723 = vmax.f32 %v721, %v640
        %v724 = vmax.f32 %v722, %v645
        %v725 = vmax.f32 %v723, %v650
        %v726 = vmax.f32 %v724, %v655
        %v727 = vmax.f32 %v725, %v660
        %v728 = vmax.f32 %v726, %v665
        %v729 = vmax.f32 %v727, %v670
        %v730 = vmax.f32 %v728, %v675
        %v731 = vmax.f32 %v729, %v680
        %v732 = vmax.f32 %v730, %v685
        %v733 = vmax.f32 %v731, %v690
        %v734 = vmax.f32 %v732, %v695
        %v735 = vmax.f32 %v733, %v734
        %v736 = vrot.slane %v735, 4
        %v737 = vmax.f32 %v735, %v736
        %v738 = vrot.slane %v737, 2
        %v739 = vmax.f32 %v737, %v738
        %v740 = vrot.slane %v739, 1
        %v741 = vmax.f32 %v739, %v740
        %v742 = vmax.f32 %v698, %v720
        %v743 = vmax.f32 %v699, %v741
        %v744 = vsub.f32 %v698, %v742
        %v745 = vsub.f32 %v699, %v743
        %v746 = vmul.f32 %v744, 1.442695
        %v747 = vpow.pop %v746
        %v748 = vmul.f32 %v745, 1.442695
        %v749 = vpow.pop %v748
        %v752 = vlaneseq
        %v753 = vshrl.u32 %v752, 7
        %v754 = vsub.s32 0, %v753
        %v755 = vrot.slane %v742, %v754
        %v756 = vlaneseq
        %v757 = vshrl.u32 %v756, 7
        %v758 = vsub.s32 0, %v757
        %v759 = vrot.slane %v743, %v758
        %v762 = vsub.f32 %v395, %v755
        %v763 = vsub.f32 %v400, %v755
        %v764 = vsub.f32 %v405, %v755
        %v765 = vsub.f32 %v410, %v755
        %v766 = vsub.f32 %v415, %v755
        %v767 = vsub.f32 %v420, %v755
        %v768 = vsub.f32 %v425, %v755
        %v769 = vsub.f32 %v430, %v755
        %v770 = vsub.f32 %v435, %v755
        %v771 = vsub.f32 %v440, %v755
        %v772 = vsub.f32 %v445, %v755
        %v773 = vsub.f32 %v450, %v755
        %v774 = vsub.f32 %v455, %v755
        %v775 = vsub.f32 %v460, %v755
        %v776 = vsub.f32 %v465, %v755
        %v777 = vsub.f32 %v470, %v755
        %v778 = vsub.f32 %v620, %v759
        %v779 = vsub.f32 %v625, %v759
        %v780 = vsub.f32 %v630, %v759
        %v781 = vsub.f32 %v635, %v759
        %v782 = vsub.f32 %v640, %v759
        %v783 = vsub.f32 %v645, %v759
        %v784 = vsub.f32 %v650, %v759
        %v785 = vsub.f32 %v655, %v759
        %v786 = vsub.f32 %v660, %v759
        %v787 = vsub.f32 %v665, %v759
        %v788 = vsub.f32 %v670, %v759
        %v789 = vsub.f32 %v675, %v759
        %v790 = vsub.f32 %v680, %v759
        %v791 = vsub.f32 %v685, %v759
        %v792 = vsub.f32 %v690, %v759
        %v793 = vsub.f32 %v695, %v759
        %v794 = vmul.f32 %v762, 1.442695
        %v795 = vpow.pop %v794
        %v796 = vmul.f32 %v763, 1.442695
        %v797 = vpow.pop %v796
        %v798 = vmul.f32 %v764, 1.442695
        %v799 = vpow.pop %v798
        %v800 = vmul.f32 %v765, 1.442695
        %v801 = vpow.pop %v800
        %v802 = vmul.f32 %v766, 1.442695
        %v803 = vpow.pop %v802
        %v804 = vmul.f32 %v767, 1.442695
        %v805 = vpow.pop %v804
        %v806 = vmul.f32 %v768, 1.442695
        %v807 = vpow.pop %v806
        %v808 = vmul.f32 %v769, 1.442695
        %v809 = vpow.pop %v808
        %v810 = vmul.f32 %v770, 1.442695
        %v811 = vpow.pop %v810
        %v812 = vmul.f32 %v771, 1.442695
        %v813 = vpow.pop %v812
        %v814 = vmul.f32 %v772, 1.442695
        %v815 = vpow.pop %v814
        %v816 = vmul.f32 %v773, 1.442695
        %v817 = vpow.pop %v816
        %v818 = vmul.f32 %v774, 1.442695
        %v819 = vpow.pop %v818
        %v820 = vmul.f32 %v775, 1.442695
        %v821 = vpow.pop %v820
        %v822 = vmul.f32 %v776, 1.442695
        %v823 = vpow.pop %v822
        %v824 = vmul.f32 %v777, 1.442695
        %v825 = vpow.pop %v824
        %v826 = vmul.f32 %v778, 1.442695
        %v827 = vpow.pop %v826
        %v828 = vmul.f32 %v779, 1.442695
        %v829 = vpow.pop %v828
        %v830 = vmul.f32 %v780, 1.442695
        %v831 = vpow.pop %v830
        %v832 = vmul.f32 %v781, 1.442695
        %v833 = vpow.pop %v832
        %v834 = vmul.f32 %v782, 1.442695
        %v835 = vpow.pop %v834
        %v836 = vmul.f32 %v783, 1.442695
        %v837 = vpow.pop %v836
        %v838 = vmul.f32 %v784, 1.442695
        %v839 = vpow.pop %v838
        %v840 = vmul.f32 %v785, 1.442695
        %v841 = vpow.pop %v840
        %v842 = vmul.f32 %v786, 1.442695
        %v843 = vpow.pop %v842
        %v844 = vmul.f32 %v787, 1.442695
        %v845 = vpow.pop %v844
        %v846 = vmul.f32 %v788, 1.442695
        %v847 = vpow.pop %v846
        %v848 = vmul.f32 %v789, 1.442695
        %v849 = vpow.pop %v848
        %v850 = vmul.f32 %v790, 1.442695
        %v851 = vpow.pop %v850
        %v852 = vmul.f32 %v791, 1.442695
        %v853 = vpow.pop %v852
        %v854 = vmul.f32 %v792, 1.442695
        %v855 = vpow.pop %v854
        %v856 = vmul.f32 %v793, 1.442695
        %v857 = vpow.pop %v856
        %v858 = vld [vmem:[#allocation3] sm:$0x1]
        %v859 = vld [vmem:[#allocation3 + $0x1] sm:$0x1]
        %v860 = vmul.f32 %v747, %v858
        %v861 = vmul.f32 %v749, %v859
        %v862 = vadd.f32 %v795, %v797
        %v863 = vadd.f32 %v862, %v799
        %v864 = vadd.f32 %v863, %v801
        %v865 = vadd.f32 %v864, %v803
        %v866 = vadd.f32 %v865, %v805
        %v867 = vadd.f32 %v866, %v807
        %v868 = vadd.f32 %v867, %v809
        %v869 = vadd.f32 %v868, %v811
        %v870 = vadd.f32 %v869, %v813
        %v871 = vadd.f32 %v870, %v815
        %v872 = vadd.f32 %v871, %v817
        %v873 = vadd.f32 %v872, %v819
        %v874 = vadd.f32 %v873, %v821
        %v875 = vadd.f32 %v874, %v823
        %v876 = vadd.f32 %v875, %v825
        %v877 = vrot.slane %v876, 4
        %v878 = vadd.f32 %v876, %v877
        %v879 = vrot.slane %v878, 2
        %v880 = vadd.f32 %v878, %v879
        %v881 = vrot.slane %v880, 1
        %v882 = vadd.f32 %v880, %v881
        %v883 = vadd.f32 %v827, %v829
        %v884 = vadd.f32 %v883, %v831
        %v885 = vadd.f32 %v884, %v833
        %v886 = vadd.f32 %v885, %v835
        %v887 = vadd.f32 %v886, %v837
        %v888 = vadd.f32 %v887, %v839
        %v889 = vadd.f32 %v888, %v841
        %v890 = vadd.f32 %v889, %v843
        %v891 = vadd.f32 %v890, %v845
        %v892 = vadd.f32 %v891, %v847
        %v893 = vadd.f32 %v892, %v849
        %v894 = vadd.f32 %v893, %v851
        %v895 = vadd.f32 %v894, %v853
        %v896 = vadd.f32 %v895, %v855
        %v897 = vadd.f32 %v896, %v857
        %v898 = vrot.slane %v897, 4
        %v899 = vadd.f32 %v897, %v898
        %v900 = vrot.slane %v899, 2
        %v901 = vadd.f32 %v899, %v900
        %v902 = vrot.slane %v901, 1
        %v903 = vadd.f32 %v901, %v902
        %v904 = vadd.f32 %v860, %v882
        %v905 = vadd.f32 %v861, %v903
        %906 = vst [vmem:[#allocation3] sm:$0x1] %v904
        %907 = vst [vmem:[#allocation3 + $0x1] sm:$0x1] %v905
        %908 = vmatprep.subr.mxu0 0.0
        %909 = vmatpush1.msra.mxu0 %v795
        %910 = vmatprep.subr.mxu0 0.0
        %911 = vmatpush1.msra.mxu0 %v797
        %912 = vmatprep.subr.mxu0 0.0
        %913 = vmatpush1.msra.mxu0 %v799
        %914 = vmatprep.subr.mxu0 0.0
        %915 = vmatpush1.msra.mxu0 %v801
        %916 = vmatprep.subr.mxu0 0.0
        %917 = vmatpush1.msra.mxu0 %v803
        %918 = vmatprep.subr.mxu0 0.0
        %919 = vmatpush1.msra.mxu0 %v805
        %920 = vmatprep.subr.mxu0 0.0
        %921 = vmatpush1.msra.mxu0 %v807
        %922 = vmatprep.subr.mxu0 0.0
        %923 = vmatpush1.msra.mxu0 %v809
        %924 = vmatprep.subr.mxu0 0.0
        %925 = vmatpush1.msra.mxu0 %v811
        %926 = vmatprep.subr.mxu0 0.0
        %927 = vmatpush1.msra.mxu0 %v813
        %928 = vmatprep.subr.mxu0 0.0
        %929 = vmatpush1.msra.mxu0 %v815
        %930 = vmatprep.subr.mxu0 0.0
        %931 = vmatpush1.msra.mxu0 %v817
        %932 = vmatprep.subr.mxu0 0.0
        %933 = vmatpush1.msra.mxu0 %v819
        %934 = vmatprep.subr.mxu0 0.0
        %935 = vmatpush1.msra.mxu0 %v821
        %936 = vmatprep.subr.mxu0 0.0
        %937 = vmatpush1.msra.mxu0 %v823
        %938 = vmatprep.subr.mxu0 0.0
        %939 = vmatpush1.msra.mxu0 %v825
        %940 = vmatprep.subr.mxu0 0.0
        %941 = vmatpush1.msra.mxu0 0.0
        %942 = vmatprep.subr.mxu0 0.0
        %943 = vmatpush1.msra.mxu0 0.0
        %944 = vmatprep.subr.mxu0 0.0
        %945 = vmatpush1.msra.mxu0 0.0
        %946 = vmatprep.subr.mxu0 0.0
        %947 = vmatpush1.msra.mxu0 0.0
        %948 = vmatprep.subr.mxu0 0.0
        %949 = vmatpush1.msra.mxu0 0.0
        %950 = vmatprep.subr.mxu0 0.0
        %951 = vmatpush1.msra.mxu0 0.0
        %952 = vmatprep.subr.mxu0 0.0
        %953 = vmatpush1.msra.mxu0 0.0
        %954 = vmatprep.subr.mxu0 0.0
        %955 = vmatpush1.msra.mxu0 0.0
        %956 = vmatprep.subr.mxu0 0.0
        %957 = vmatpush1.msra.mxu0 0.0
        %958 = vmatprep.subr.mxu0 0.0
        %959 = vmatpush1.msra.mxu0 0.0
        %960 = vmatprep.subr.mxu0 0.0
        %961 = vmatpush1.msra.mxu0 0.0
        %962 = vmatprep.subr.mxu0 0.0
        %963 = vmatpush1.msra.mxu0 0.0
        %964 = vmatprep.subr.mxu0 0.0
        %965 = vmatpush1.msra.mxu0 0.0
        %966 = vmatprep.subr.mxu0 0.0
        %967 = vmatpush1.msra.mxu0 0.0
        %968 = vmatprep.subr.mxu0 0.0
        %969 = vmatpush1.msra.mxu0 0.0
        %970 = vmatprep.subr.mxu0 0.0
        %971 = vmatpush1.msra.mxu0 0.0
        %972 = vmatprep.mubr.f32.mxu0 0.0
        %973 = vmatmul.mubr.f32.gmra.mrb[0].mxu0 %v223
        %v974 = vpop.f32.mrb[0].mxu0
        %v975 = vadd.f32 0.0, %v974
        %v976 = vpop.f32.mrb[0].mxu0
        %977 = vmatprep.mubr.f32.mxu0 0.0
        %978 = vmatmul.mubr.f32.gmra.mrb[0].mxu0 %v224
        %v979 = vpop.f32.mrb[0].mxu0
        %v980 = vadd.f32 0.0, %v979
        %v981 = vpop.f32.mrb[0].mxu0
        %982 = vmatprep.mubr.f32.mxu0 0.0
        %983 = vmatmul.mubr.f32.gmra.mrb[0].mxu0 %v225
        %v984 = vpop.f32.mrb[0].mxu0
        %v985 = vadd.f32 0.0, %v984
        %v986 = vpop.f32.mrb[0].mxu0
        %987 = vmatprep.mubr.f32.mxu0 0.0
        %988 = vmatmul.mubr.f32.gmra.mrb[0].mxu0 %v226
        %v989 = vpop.f32.mrb[0].mxu0
        %v990 = vadd.f32 0.0, %v989
        %v991 = vpop.f32.mrb[0].mxu0
        %992 = vmatprep.mubr.f32.mxu0 0.0
        %993 = vmatmul.mubr.f32.gmra.mrb[0].mxu0 %v227
        %v994 = vpop.f32.mrb[0].mxu0
        %v995 = vadd.f32 0.0, %v994
        %v996 = vpop.f32.mrb[0].mxu0
        %997 = vmatprep.mubr.f32.mxu0 0.0
        %998 = vmatmul.mubr.f32.gmra.mrb[0].mxu0 %v228
        %v999 = vpop.f32.mrb[0].mxu0
        %v1000 = vadd.f32 0.0, %v999
        %v1001 = vpop.f32.mrb[0].mxu0
        %1002 = vmatprep.mubr.f32.mxu0 0.0
        %1003 = vmatmul.mubr.f32.gmra.mrb[0].mxu0 %v229
        %v1004 = vpop.f32.mrb[0].mxu0
        %v1005 = vadd.f32 0.0, %v1004
        %v1006 = vpop.f32.mrb[0].mxu0
        %1007 = vmatprep.mubr.f32.mxu0 0.0
        %1008 = vmatmul.mubr.f32.gmra.mrb[0].mxu0 %v230
        %v1009 = vpop.f32.mrb[0].mxu0
        %v1010 = vadd.f32 0.0, %v1009
        %v1011 = vpop.f32.mrb[0].mxu0
        %1012 = vdwg.mxu0
        %1013 = vmatprep.subr.mxu0 0.0
        %1014 = vmatpush1.msra.mxu0 %v827
        %1015 = vmatprep.subr.mxu0 0.0
        %1016 = vmatpush1.msra.mxu0 %v829
        %1017 = vmatprep.subr.mxu0 0.0
        %1018 = vmatpush1.msra.mxu0 %v831
        %1019 = vmatprep.subr.mxu0 0.0
        %1020 = vmatpush1.msra.mxu0 %v833
        %1021 = vmatprep.subr.mxu0 0.0
        %1022 = vmatpush1.msra.mxu0 %v835
        %1023 = vmatprep.subr.mxu0 0.0
        %1024 = vmatpush1.msra.mxu0 %v837
        %1025 = vmatprep.subr.mxu0 0.0
        %1026 = vmatpush1.msra.mxu0 %v839
        %1027 = vmatprep.subr.mxu0 0.0
        %1028 = vmatpush1.msra.mxu0 %v841
        %1029 = vmatprep.subr.mxu0 0.0
        %1030 = vmatpush1.msra.mxu0 %v843
        %1031 = vmatprep.subr.mxu0 0.0
        %1032 = vmatpush1.msra.mxu0 %v845
        %1033 = vmatprep.subr.mxu0 0.0
        %1034 = vmatpush1.msra.mxu0 %v847
        %1035 = vmatprep.subr.mxu0 0.0
        %1036 = vmatpush1.msra.mxu0 %v849
        %1037 = vmatprep.subr.mxu0 0.0
        %1038 = vmatpush1.msra.mxu0 %v851
        %1039 = vmatprep.subr.mxu0 0.0
        %1040 = vmatpush1.msra.mxu0 %v853
        %1041 = vmatprep.subr.mxu0 0.0
        %1042 = vmatpush1.msra.mxu0 %v855
        %1043 = vmatprep.subr.mxu0 0.0
        %1044 = vmatpush1.msra.mxu0 %v857
        %1045 = vmatprep.subr.mxu0 0.0
        %1046 = vmatpush1.msra.mxu0 0.0
        %1047 = vmatprep.subr.mxu0 0.0
        %1048 = vmatpush1.msra.mxu0 0.0
        %1049 = vmatprep.subr.mxu0 0.0
        %1050 = vmatpush1.msra.mxu0 0.0
        %1051 = vmatprep.subr.mxu0 0.0
        %1052 = vmatpush1.msra.mxu0 0.0
        %1053 = vmatprep.subr.mxu0 0.0
        %1054 = vmatpush1.msra.mxu0 0.0
        %1055 = vmatprep.subr.mxu0 0.0
        %1056 = vmatpush1.msra.mxu0 0.0
        %1057 = vmatprep.subr.mxu0 0.0
        %1058 = vmatpush1.msra.mxu0 0.0
        %1059 = vmatprep.subr.mxu0 0.0
        %1060 = vmatpush1.msra.mxu0 0.0
        %1061 = vmatprep.subr.mxu0 0.0
        %1062 = vmatpush1.msra.mxu0 0.0
        %1063 = vmatprep.subr.mxu0 0.0
        %1064 = vmatpush1.msra.mxu0 0.0
        %1065 = vmatprep.subr.mxu0 0.0
        %1066 = vmatpush1.msra.mxu0 0.0
        %1067 = vmatprep.subr.mxu0 0.0
        %1068 = vmatpush1.msra.mxu0 0.0
        %1069 = vmatprep.subr.mxu0 0.0
        %1070 = vmatpush1.msra.mxu0 0.0
        %1071 = vmatprep.subr.mxu0 0.0
        %1072 = vmatpush1.msra.mxu0 0.0
        %1073 = vmatprep.subr.mxu0 0.0
        %1074 = vmatpush1.msra.mxu0 0.0
        %1075 = vmatprep.subr.mxu0 0.0
        %1076 = vmatpush1.msra.mxu0 0.0
        %1077 = vmatprep.mubr.f32.mxu0 0.0
        %1078 = vmatmul.mubr.f32.gmra.mrb[0].mxu0 %v239
        %v1079 = vpop.f32.mrb[0].mxu0
        %v1080 = vadd.f32 0.0, %v1079
        %v1081 = vpop.f32.mrb[0].mxu0
        %1082 = vmatprep.mubr.f32.mxu0 0.0
        %1083 = vmatmul.mubr.f32.gmra.mrb[0].mxu0 %v240
        %v1084 = vpop.f32.mrb[0].mxu0
        %v1085 = vadd.f32 0.0, %v1084
        %v1086 = vpop.f32.mrb[0].mxu0
        %1087 = vmatprep.mubr.f32.mxu0 0.0
        %1088 = vmatmul.mubr.f32.gmra.mrb[0].mxu0 %v241
        %v1089 = vpop.f32.mrb[0].mxu0
        %v1090 = vadd.f32 0.0, %v1089
        %v1091 = vpop.f32.mrb[0].mxu0
        %1092 = vmatprep.mubr.f32.mxu0 0.0
        %1093 = vmatmul.mubr.f32.gmra.mrb[0].mxu0 %v242
        %v1094 = vpop.f32.mrb[0].mxu0
        %v1095 = vadd.f32 0.0, %v1094
        %v1096 = vpop.f32.mrb[0].mxu0
        %1097 = vmatprep.mubr.f32.mxu0 0.0
        %1098 = vmatmul.mubr.f32.gmra.mrb[0].mxu0 %v243
        %v1099 = vpop.f32.mrb[0].mxu0
        %v1100 = vadd.f32 0.0, %v1099
        %v1101 = vpop.f32.mrb[0].mxu0
        %1102 = vmatprep.mubr.f32.mxu0 0.0
        %1103 = vmatmul.mubr.f32.gmra.mrb[0].mxu0 %v244
        %v1104 = vpop.f32.mrb[0].mxu0
        %v1105 = vadd.f32 0.0, %v1104
        %v1106 = vpop.f32.mrb[0].mxu0
        %1107 = vmatprep.mubr.f32.mxu0 0.0
        %1108 = vmatmul.mubr.f32.gmra.mrb[0].mxu0 %v245
        %v1109 = vpop.f32.mrb[0].mxu0
        %v1110 = vadd.f32 0.0, %v1109
        %v1111 = vpop.f32.mrb[0].mxu0
        %1112 = vmatprep.mubr.f32.mxu0 0.0
        %1113 = vmatmul.mubr.f32.gmra.mrb[0].mxu0 %v246
        %v1114 = vpop.f32.mrb[0].mxu0
        %v1115 = vadd.f32 0.0, %v1114
        %v1116 = vpop.f32.mrb[0].mxu0
        %1117 = vdwg.mxu0
        %v1118 = vld [vmem:[#allocation4] sm:$0xff]
        %v1119 = vld [vmem:[#allocation4 + $0x8] sm:$0xff]
        %v1120 = vld [vmem:[#allocation4 + $0x10] sm:$0xff]
        %v1121 = vld [vmem:[#allocation4 + $0x18] sm:$0xff]
        %v1122 = vld [vmem:[#allocation4 + $0x20] sm:$0xff]
        %v1123 = vld [vmem:[#allocation4 + $0x28] sm:$0xff]
        %v1124 = vld [vmem:[#allocation4 + $0x30] sm:$0xff]
        %v1125 = vld [vmem:[#allocation4 + $0x38] sm:$0xff]
        %v1126 = vld [vmem:[#allocation4 + $0x40] sm:$0xff]
        %v1127 = vld [vmem:[#allocation4 + $0x48] sm:$0xff]
        %v1128 = vld [vmem:[#allocation4 + $0x50] sm:$0xff]
        %v1129 = vld [vmem:[#allocation4 + $0x58] sm:$0xff]
        %v1130 = vld [vmem:[#allocation4 + $0x60] sm:$0xff]
        %v1131 = vld [vmem:[#allocation4 + $0x68] sm:$0xff]
        %v1132 = vld [vmem:[#allocation4 + $0x70] sm:$0xff]
        %v1133 = vld [vmem:[#allocation4 + $0x78] sm:$0xff]
        %v1136 = vlaneseq
        %v1137 = vshrl.u32 %v1136, 7
        %v1138 = vsub.s32 0, %v1137
        %v1139 = vrot.slane %v747, %v1138
        %v1140 = vlaneseq
        %v1141 = vshrl.u32 %v1140, 7
        %v1142 = vsub.s32 0, %v1141
        %v1143 = vrot.slane %v749, %v1142
        %v1146 = vmul.f32 %v1139, %v1118
        %v1147 = vmul.f32 %v1139, %v1119
        %v1148 = vmul.f32 %v1139, %v1120
        %v1149 = vmul.f32 %v1139, %v1121
        %v1150 = vmul.f32 %v1139, %v1122
        %v1151 = vmul.f32 %v1139, %v1123
        %v1152 = vmul.f32 %v1139, %v1124
        %v1153 = vmul.f32 %v1139, %v1125
        %v1154 = vmul.f32 %v1143, %v1126
        %v1155 = vmul.f32 %v1143, %v1127
        %v1156 = vmul.f32 %v1143, %v1128
        %v1157 = vmul.f32 %v1143, %v1129
        %v1158 = vmul.f32 %v1143, %v1130
        %v1159 = vmul.f32 %v1143, %v1131
        %v1160 = vmul.f32 %v1143, %v1132
        %v1161 = vmul.f32 %v1143, %v1133
        %v1162 = vadd.f32 %v1146, %v975
        %v1163 = vadd.f32 %v1147, %v980
        %v1164 = vadd.f32 %v1148, %v985
        %v1165 = vadd.f32 %v1149, %v990
        %v1166 = vadd.f32 %v1150, %v995
        %v1167 = vadd.f32 %v1151, %v1000
        %v1168 = vadd.f32 %v1152, %v1005
        %v1169 = vadd.f32 %v1153, %v1010
        %v1170 = vadd.f32 %v1154, %v1080
        %v1171 = vadd.f32 %v1155, %v1085
        %v1172 = vadd.f32 %v1156, %v1090
        %v1173 = vadd.f32 %v1157, %v1095
        %v1174 = vadd.f32 %v1158, %v1100
        %v1175 = vadd.f32 %v1159, %v1105
        %v1176 = vadd.f32 %v1160, %v1110
        %v1177 = vadd.f32 %v1161, %v1115
        %1178 = vst [vmem:[#allocation4] sm:$0xff] %v1162
        %1179 = vst [vmem:[#allocation4 + $0x8] sm:$0xff] %v1163
        %1180 = vst [vmem:[#allocation4 + $0x10] sm:$0xff] %v1164
        %1181 = vst [vmem:[#allocation4 + $0x18] sm:$0xff] %v1165
        %1182 = vst [vmem:[#allocation4 + $0x20] sm:$0xff] %v1166
        %1183 = vst [vmem:[#allocation4 + $0x28] sm:$0xff] %v1167
        %1184 = vst [vmem:[#allocation4 + $0x30] sm:$0xff] %v1168
        %1185 = vst [vmem:[#allocation4 + $0x38] sm:$0xff] %v1169
        %1186 = vst [vmem:[#allocation4 + $0x40] sm:$0xff] %v1170
        %1187 = vst [vmem:[#allocation4 + $0x48] sm:$0xff] %v1171
        %1188 = vst [vmem:[#allocation4 + $0x50] sm:$0xff] %v1172
        %1189 = vst [vmem:[#allocation4 + $0x58] sm:$0xff] %v1173
        %1190 = vst [vmem:[#allocation4 + $0x60] sm:$0xff] %v1174
        %1191 = vst [vmem:[#allocation4 + $0x68] sm:$0xff] %v1175
        %1192 = vst [vmem:[#allocation4 + $0x70] sm:$0xff] %v1176
        %1193 = vst [vmem:[#allocation4 + $0x78] sm:$0xff] %v1177
        %1194 = vst [vmem:[#allocation2] sm:$0x1] %v742
        %1195 = vst [vmem:[#allocation2 + $0x1] sm:$0x1] %v743
        // Predicated region
        $region33: #{tpu_custom_call.1} parent=23 // pred_check
          %p1196 = pneg %p191
        $region34: #{tpu_custom_call.1} parent=23 // pred_check_branch
          %1198 = sbr.rel (%p1196) target = $region36
        $region35: #{tpu_custom_call.1} parent=23 // pred_region
          %v1199 = vld [vmem:[#allocation3] sm:$0x1]
          %v1200 = vld [vmem:[#allocation3 + $0x1] sm:$0x1]
          %v1201 = vrcp.pop %v1199
          %v1202 = vrcp.pop %v1200
          %v1203 = vmul.f32 %v1199, %v1201
          %v1204 = vmul.f32 %v1200, %v1202
          %v1205 = vsub.f32 2.0, %v1203
          %v1206 = vsub.f32 2.0, %v1204
          %v1207 = vmul.f32 %v1201, %v1205
          %v1208 = vmul.f32 %v1202, %v1206
          %v1209 = vld [vmem:[#allocation4] sm:$0xff]
          %v1210 = vld [vmem:[#allocation4 + $0x8] sm:$0xff]
          %v1211 = vld [vmem:[#allocation4 + $0x10] sm:$0xff]
          %v1212 = vld [vmem:[#allocation4 + $0x18] sm:$0xff]
          %v1213 = vld [vmem:[#allocation4 + $0x20] sm:$0xff]
          %v1214 = vld [vmem:[#allocation4 + $0x28] sm:$0xff]
          %v1215 = vld [vmem:[#allocation4 + $0x30] sm:$0xff]
          %v1216 = vld [vmem:[#allocation4 + $0x38] sm:$0xff]
          %v1217 = vld [vmem:[#allocation4 + $0x40] sm:$0xff]
          %v1218 = vld [vmem:[#allocation4 + $0x48] sm:$0xff]
          %v1219 = vld [vmem:[#allocation4 + $0x50] sm:$0xff]
          %v1220 = vld [vmem:[#allocation4 + $0x58] sm:$0xff]
          %v1221 = vld [vmem:[#allocation4 + $0x60] sm:$0xff]
          %v1222 = vld [vmem:[#allocation4 + $0x68] sm:$0xff]
          %v1223 = vld [vmem:[#allocation4 + $0x70] sm:$0xff]
          %v1224 = vld [vmem:[#allocation4 + $0x78] sm:$0xff]
          %v1227 = vlaneseq
          %v1228 = vshrl.u32 %v1227, 7
          %v1229 = vsub.s32 0, %v1228
          %v1230 = vrot.slane %v1207, %v1229
          %v1231 = vlaneseq
          %v1232 = vshrl.u32 %v1231, 7
          %v1233 = vsub.s32 0, %v1232
          %v1234 = vrot.slane %v1208, %v1233
          %v1237 = vmul.f32 %v1209, %v1230
          %v1238 = vmul.f32 %v1210, %v1230
          %v1239 = vmul.f32 %v1211, %v1230
          %v1240 = vmul.f32 %v1212, %v1230
          %v1241 = vmul.f32 %v1213, %v1230
          %v1242 = vmul.f32 %v1214, %v1230
          %v1243 = vmul.f32 %v1215, %v1230
          %v1244 = vmul.f32 %v1216, %v1230
          %v1245 = vmul.f32 %v1217, %v1234
          %v1246 = vmul.f32 %v1218, %v1234
          %v1247 = vmul.f32 %v1219, %v1234
          %v1248 = vmul.f32 %v1220, %v1234
          %v1249 = vmul.f32 %v1221, %v1234
          %v1250 = vmul.f32 %v1222, %v1234
          %v1251 = vmul.f32 %v1223, %v1234
          %v1252 = vmul.f32 %v1224, %v1234
          %1253 = vst [vmem:[%s158] sm:$0xff] %v1237
          %1254 = vst [vmem:[%s158 + $0x8] sm:$0xff] %v1238
          %1255 = vst [vmem:[%s158 + $0x10] sm:$0xff] %v1239
          %1256 = vst [vmem:[%s158 + $0x18] sm:$0xff] %v1240
          %1257 = vst [vmem:[%s158 + $0x20] sm:$0xff] %v1241
          %1258 = vst [vmem:[%s158 + $0x28] sm:$0xff] %v1242
          %1259 = vst [vmem:[%s158 + $0x30] sm:$0xff] %v1243
          %1260 = vst [vmem:[%s158 + $0x38] sm:$0xff] %v1244
          %1261 = vst [vmem:[%s158 + $0x40] sm:$0xff] %v1245
          %1262 = vst [vmem:[%s158 + $0x48] sm:$0xff] %v1246
          %1263 = vst [vmem:[%s158 + $0x50] sm:$0xff] %v1247
          %1264 = vst [vmem:[%s158 + $0x58] sm:$0xff] %v1248
          %1265 = vst [vmem:[%s158 + $0x60] sm:$0xff] %v1249
          %1266 = vst [vmem:[%s158 + $0x68] sm:$0xff] %v1250
          %1267 = vst [vmem:[%s158 + $0x70] sm:$0xff] %v1251
          %1268 = vst [vmem:[%s158 + $0x78] sm:$0xff] %v1252
        $region36: #{tpu_custom_call.1} parent=23 // pred_fallthru
          _
        %s1269 = sand.u32 %s75, 1
        %s1270 = scalar_lea.sflag [#allocation7], %s1269
        %s1271 = sand.u32 %s75, 1
        %s1272 = smul.addr %s1271, 128
        %s1273 = scalar_lea.vmem [#allocation8], %s1272
        // Predicated region
        $region37: #{tpu_custom_call.1} parent=23 // pred_check
          %p1274 = pneg %p85
        $region38: #{tpu_custom_call.1} parent=23 // pred_check_branch
          %1276 = sbr.rel (%p1274) target = $region40
        $region39: #{tpu_custom_call.1} parent=23 // pred_region
          %s1278 = ssub.s32 2048, 2048
          %1279 = vsyncadd %s1270, %s1278
          %s1280 = smul.addr %s23, 16
          %s1281 = sadd.s32 %s24, %s1280
          %s1282 = smul.addr %s1281, 128
          %s1283 = scalar_lea.hbm %s1, %s1282
          %s1284 = sshll.u32 %s1273, 4
          %s1285 = int_to_ptr.vmem [resolvable:$true] %s1284
          %1290 = dma.vmem_to_hbm [thread:$0]  %s1285, 2048, %s1283, %s1270, 128, 128, 8
        $region40: #{tpu_custom_call.1} parent=23 // pred_fallthru
          _
      $region24: #{tpu_custom_call.1} parent=5 // pred_fallthru
        _
      %p1291 = scmp.le.s32.totalorder 2, %s13
      // Predicated region
      $region41: #{tpu_custom_call.1} parent=5 // pred_check
        %p1292 = pneg %p1291
      $region42: #{tpu_custom_call.1} parent=5 // pred_check_branch
        %1294 = sbr.rel (%p1292) target = $region44
      $region43: #{tpu_custom_call.1} parent=5 // pred_region
        %s1295 = ssub.s32 %s13, 2
        // Predicated region
        $region45: #{tpu_custom_call.1} parent=43 // pred_check
          %p1296 = pneg %p91
        $region46: #{tpu_custom_call.1} parent=43 // pred_check_branch
          %1298 = sbr.rel (%p1296) target = $region48
        $region47: #{tpu_custom_call.1} parent=43 // pred_region
          %s1299 = sand.u32 %s76, 1
          %s1300 = scalar_lea.sflag [#allocation7], %s1299
          %s1301 = sand.u32 %s76, 1
          %s1302 = smul.addr %s1301, 128
          %s1303 = scalar_lea.vmem [#allocation8], %s1302
          %1304 = dma.done %s1300, 2048
        $region48: #{tpu_custom_call.1} parent=43 // pred_fallthru
          _
      $region44: #{tpu_custom_call.1} parent=5 // pred_fallthru
        _
    $region6: #{tpu_custom_call.1} parent=1 // loop_footer
      %s17 = sadd.s32 1, %s13
    $region7: #{tpu_custom_call.1} parent=1 // loop_footer_branch
      %12 = sbr.rel target = $region3
    $region8: #{tpu_custom_call.1} parent=1 // loop_exit
      _
    %1305 = vsyncpa [#allocation6], 1
    %s1306 = scalar_lea.sflag [#allocation6], 1
    %1307 = vsyncpa %s1306, 1
    %1308 = vsyncpa [#allocation7], 1
    %s1309 = scalar_lea.sflag [#allocation7], 1
    %1310 = vsyncpa %s1309, 1

</llo_original>
